<compile_context>
chip_gen: v7x
topology: tpu7x:2x2x1
jax: 0.10.0
libtpu: 0.0.40
codegen_flags: <defaults>
</compile_context>

<pallas_src>
import functools
import math

import jax
import jax.numpy as jnp
import numpy as np
from jax.experimental import pallas as pl
from jax.experimental.pallas import tpu as pltpu


# ----------------------------------------------------------------------------
# Single fused Pallas kernel: encoder layer + mean-pool + classification head
# ----------------------------------------------------------------------------
def _encoder_head_kernel(seq_ref, wqkv_ref, bqkv_ref, wo_ref, bo_ref,
                         ln1g_ref, ln1b_ref, w1_ref, b1_ref, w2_ref, b2_ref,
                         ln2g_ref, ln2b_ref, whead_ref, bhead_ref,
                         out_ref, *, num_head, eps):
    f32, bf16 = jnp.float32, jnp.bfloat16
    seq = seq_ref[...]                                   # (S, D) f32
    S, D = seq.shape
    Dh = D // num_head

    def layer_norm(y, g, b):
        mean = jnp.mean(y, axis=-1, keepdims=True)
        var = jnp.mean(jnp.square(y - mean), axis=-1, keepdims=True)
        return (y - mean) * jax.lax.rsqrt(var + eps) * g + b

    # ---- multi-head self-attention (1/sqrt(Dh) pre-folded into wqkv/bqkv) ---
    qkv = jnp.dot(seq.astype(bf16), wqkv_ref[...],
                  preferred_element_type=f32) + bqkv_ref[...]      # (S, 3D) f32
    wo = wo_ref[...]                                               # (D, D) f32
    attn = jnp.zeros((S, D), f32)
    for h in range(num_head):        # heads unrolled; D stays on the lane axis
        lo = h * Dh
        qh = qkv[:, lo:lo + Dh].astype(bf16)             # (S, Dh)
        kh = qkv[:, D + lo:D + lo + Dh].astype(bf16)
        vh = qkv[:, 2 * D + lo:2 * D + lo + Dh].astype(bf16)
        s = jax.lax.dot_general(qh, kh, (((1,), (1,)), ((), ())),
                                preferred_element_type=f32)        # (S, S)
        p = jnp.exp(s - jnp.max(s, axis=-1, keepdims=True))
        p = p * pl.reciprocal(jnp.sum(p, axis=-1, keepdims=True), approx=True)
        oh = jnp.dot(p.astype(bf16), vh, preferred_element_type=f32)  # (S, Dh)
        # fold the head-concat into per-head row slices of the out projection
        attn = attn + jnp.dot(oh.astype(bf16), wo[lo:lo + Dh, :].astype(bf16),
                              preferred_element_type=f32)
    attn = attn + bo_ref[...]

    # ---- post-norm residual 1: LayerNorm(x + attn) ----
    h1 = layer_norm(seq + attn, ln1g_ref[...], ln1b_ref[...])

    # ---- FFN: ReLU(h1 W1 + b1) W2 + b2, then post-norm residual 2 ----
    f = jnp.dot(h1.astype(bf16), w1_ref[...],
                preferred_element_type=f32) + b1_ref[...]          # (S, mlp)
    f = jnp.maximum(f, 0.0)
    f = jnp.dot(f.astype(bf16), w2_ref[...],
                preferred_element_type=f32) + b2_ref[...]          # (S, D)
    enc = layer_norm(h1 + f, ln2g_ref[...], ln2b_ref[...])

    # ---- torch.mean(patches[:, 1:], dim=1) + classification head ----
    pooled = (jnp.sum(enc, axis=0, keepdims=True) - enc[0:1, :]) * (1.0 / (S - 1))
    out_ref[...] = jnp.dot(pooled.astype(bf16), whead_ref[...],
                           preferred_element_type=f32) + bhead_ref[...]


# ----------------------------------------------------------------------------
# Parameter init (torch layout, deterministic) + one-time preparation
# ----------------------------------------------------------------------------
def init_params(key, *, num_classes, patch_size, in_channel, embed_dim, mlp_dim):
    ks = jax.random.split(key, 12)
    s = 0.05
    D = embed_dim
    return {
        "conv_w": jax.random.normal(ks[0], (D, in_channel, patch_size, patch_size)) * s,
        "conv_b": jax.random.normal(ks[1], (D,)) * s,
        "class_token": jnp.zeros((1, 1, D), jnp.float32),      # torch.zeros(1,1,D)
        "in_proj_w": jax.random.normal(ks[2], (3 * D, D)) * s,
        "in_proj_b": jax.random.normal(ks[3], (3 * D,)) * s,
        "out_proj_w": jax.random.normal(ks[4], (D, D)) * s,
        "out_proj_b": jax.random.normal(ks[5], (D,)) * s,
        "lin1_w": jax.random.normal(ks[6], (mlp_dim, D)) * s,
        "lin1_b": jax.random.normal(ks[7], (mlp_dim,)) * s,
        "lin2_w": jax.random.normal(ks[8], (D, mlp_dim)) * s,
        "lin2_b": jax.random.normal(ks[9], (D,)) * s,
        "ln1_g": jnp.ones((D,), jnp.float32),
        "ln1_b": jnp.zeros((D,), jnp.float32),
        "ln2_g": jnp.ones((D,), jnp.float32),
        "ln2_b": jnp.zeros((D,), jnp.float32),
        "head_w": jax.random.normal(ks[10], (num_classes, D)) * s,
        "head_b": jax.random.normal(ks[11], (num_classes,)) * s,
    }


def prepare_params(raw, *, patch_size, in_channel, image_size, embed_dim,
                   num_head, num_classes):
    """One-time prep: pre-transpose weights, fold attention scale, pad head."""
    k, C = patch_size, in_channel
    H, W = image_size
    D = embed_dim
    Dh = D // num_head
    Hp, Wp = H - k + 1, W - k + 1          # Conv2d default stride = 1
    N = Hp * Wp

    # im2col gather indices (one XLA gather per forward, no slice/stack chain)
    idx = np.empty((N, C * k * k), np.int32)
    for s in range(N):
        h0, w0 = divmod(s, Wp)
        for q in range(C * k * k):
            c, rem = divmod(q, k * k)
            ki, kj = divmod(rem, k)
            idx[s, q] = c * H * W + (h0 + ki) * W + (w0 + kj)

    scale = 1.0 / math.sqrt(Dh)
    wqkv = np.array(raw["in_proj_w"], np.float32).T.copy()       # (D, 3D)
    bqkv = np.array(raw["in_proj_b"], np.float32).copy()
    wqkv[:, :D] *= scale                 # fold 1/sqrt(Dh) into the q projection
    bqkv[:D] *= scale

    nc_pad = ((num_classes + 127) // 128) * 128          # lane-dense head output
    whead = np.zeros((D, nc_pad), np.float32)
    whead[:, :num_classes] = np.array(raw["head_w"], np.float32).T
    bhead = np.zeros((1, nc_pad), np.float32)
    bhead[0, :num_classes] = np.array(raw["head_b"], np.float32)

    bf16, f32 = jnp.bfloat16, jnp.float32
    return {
        "im2col_idx": jnp.asarray(idx),
        "w_patch": jnp.asarray(np.array(raw["conv_w"], np.float32).reshape(D, -1).T),
        "b_patch": jnp.asarray(np.array(raw["conv_b"], np.float32).reshape(1, D)),
        "cls_rows": jnp.asarray(
            np.tile(np.array(raw["class_token"], np.float32).reshape(1, D), (N, 1))),
        "wqkv": jnp.asarray(wqkv, bf16),                 # (D, 3D), q pre-scaled
        "bqkv": jnp.asarray(bqkv.reshape(1, 3 * D), f32),
        "wo": jnp.asarray(np.array(raw["out_proj_w"], np.float32).T),   # (D, D)
        "bo": jnp.asarray(np.array(raw["out_proj_b"], np.float32).reshape(1, D)),
        "ln1g": jnp.asarray(np.array(raw["ln1_g"], np.float32).reshape(1, D)),
        "ln1b": jnp.asarray(np.array(raw["ln1_b"], np.float32).reshape(1, D)),
        "w1": jnp.asarray(np.array(raw["lin1_w"], np.float32).T, bf16),  # (D, mlp)
        "b1": jnp.asarray(np.array(raw["lin1_b"], np.float32).reshape(1, -1), f32),
        "w2": jnp.asarray(np.array(raw["lin2_w"], np.float32).T, bf16),  # (mlp, D)
        "b2": jnp.asarray(np.array(raw["lin2_b"], np.float32).reshape(1, D)),
        "ln2g": jnp.asarray(np.array(raw["ln2_g"], np.float32).reshape(1, D)),
        "ln2b": jnp.asarray(np.array(raw["ln2_b"], np.float32).reshape(1, D)),
        "whead": jnp.asarray(whead, bf16),               # (D, 128) zero-padded
        "bhead": jnp.asarray(bhead, f32),
    }


# ----------------------------------------------------------------------------
# Forward pass: minimal XLA glue for patch embedding, one fused Pallas kernel
# ----------------------------------------------------------------------------
def vit_forward(x, p, *, num_head, num_classes, eps=1e-5):
    B, C, H, W = x.shape
    # torch's cat(class_token.repeat(1, N, 1)) only type-checks for batch == 1.
    assert B == 1, "the reference PyTorch forward only supports batch == 1"
    N = p["im2col_idx"].shape[0]
    D = p["wqkv"].shape[0]
    nc_pad = p["whead"].shape[1]

    # --- patch embedding: Conv2d(stride=1) via single-gather im2col + dot ----
    cols = x.reshape(C * H * W)[p["im2col_idx"]]                    # (N, C*k*k)
    y = jnp.dot(cols, p["w_patch"],
                preferred_element_type=jnp.float32) + p["b_patch"]  # (N, D)
    # torch.flatten(NCHW, 1, -1).view(B, -1, D): contiguous reinterpretation
    tokens = y.T.reshape(N, D)
    # class_token.repeat(1, N, 1) + cat(dim=1): N class tokens appended at END
    seq = jnp.concatenate([tokens, p["cls_rows"]], axis=0)          # (S, D)
    S = 2 * N

    args = (seq, p["wqkv"], p["bqkv"], p["wo"], p["bo"],
            p["ln1g"], p["ln1b"], p["w1"], p["b1"], p["w2"], p["b2"],
            p["ln2g"], p["ln2b"], p["whead"], p["bhead"])

    def _full(shape):
        nd = len(shape)
        return pl.BlockSpec(tuple(shape), lambda i, _nd=nd: (0,) * _nd)

    logits_pad = pl.pallas_call(
        functools.partial(_encoder_head_kernel, num_head=num_head, eps=eps),
        out_shape=jax.ShapeDtypeStruct((1, nc_pad), jnp.float32),
        grid=(1,),
        in_specs=[_full(a.shape) for a in args],
        out_specs=_full((1, nc_pad)),
        compiler_params=pltpu.CompilerParams(dimension_semantics=("arbitrary",)),
    )(*args)
    return logits_pad[:, :num_classes]                              # (1, NC)


# ----------------------------------------------------------------------------
if __name__ == "__main__":
    num_classes, patch_size, in_channel = 10, 4, 3
    embed_dim, num_head, mlp_dim = 32, 4, 64
    H = W = 8

    key = jax.random.PRNGKey(0)
    k_param, k_x = jax.random.split(key)
    raw = init_params(
        k_param,
        num_classes=num_classes,
        patch_size=patch_size,
        in_channel=in_channel,
        embed_dim=embed_dim,
        mlp_dim=mlp_dim,
    )
    params = prepare_params(
        raw,
        patch_size=patch_size,
        in_channel=in_channel,
        image_size=(H, W),
        embed_dim=embed_dim,
        num_head=num_head,
        num_classes=num_classes,
    )

    # batch=1 (the torch forward's cat only works for batch 1), 3x8x8 image
    x = jax.random.normal(k_x, (1, in_channel, H, W), jnp.float32)

    fwd = jax.jit(functools.partial(vit_forward, num_head=num_head,
                                    num_classes=num_classes))
    out = fwd(x, params)
    out = jax.block_until_ready(out)
    assert out.shape == (1, num_classes) and out.dtype == jnp.float32
    assert bool(jnp.all(jnp.isfinite(out)))
    print("KERNEL_OK")
</pallas_src>

<mosaic_0001>
module attributes {stable_mosaic.version = 11 : i64} {
  func.func @_encoder_head_kernel(%arg0: i32, %arg1: memref<50x32xf32, #tpu.memory_space<vmem>>, %arg2: memref<32x96xbf16, #tpu.memory_space<vmem>>, %arg3: memref<1x96xf32, #tpu.memory_space<vmem>>, %arg4: memref<32x32xf32, #tpu.memory_space<vmem>>, %arg5: memref<1x32xf32, #tpu.memory_space<vmem>>, %arg6: memref<1x32xf32, #tpu.memory_space<vmem>>, %arg7: memref<1x32xf32, #tpu.memory_space<vmem>>, %arg8: memref<32x64xbf16, #tpu.memory_space<vmem>>, %arg9: memref<1x64xf32, #tpu.memory_space<vmem>>, %arg10: memref<64x32xbf16, #tpu.memory_space<vmem>>, %arg11: memref<1x32xf32, #tpu.memory_space<vmem>>, %arg12: memref<1x32xf32, #tpu.memory_space<vmem>>, %arg13: memref<1x32xf32, #tpu.memory_space<vmem>>, %arg14: memref<32x128xbf16, #tpu.memory_space<vmem>>, %arg15: memref<1x128xf32, #tpu.memory_space<vmem>>, %arg16: memref<1x128xf32, #tpu.memory_space<vmem>>) attributes {dimension_semantics = [#tpu.dimension_semantics<arbitrary>], iteration_bounds = array<i64: 1>, scalar_prefetch = 0 : i64, scratch_operands = 0 : i64, tpu.core_type = #tpu.core_type<tc>, window_params = [{pipeline_mode = #tpu.pipeline_mode<synchronous>, transform_indices = @transform_0, window_bounds = array<i64: 50, 32>}, {pipeline_mode = #tpu.pipeline_mode<synchronous>, transform_indices = @transform_1, window_bounds = array<i64: 32, 96>}, {pipeline_mode = #tpu.pipeline_mode<synchronous>, transform_indices = @transform_2, window_bounds = array<i64: 1, 96>}, {pipeline_mode = #tpu.pipeline_mode<synchronous>, transform_indices = @transform_3, window_bounds = array<i64: 32, 32>}, {pipeline_mode = #tpu.pipeline_mode<synchronous>, transform_indices = @transform_4, window_bounds = array<i64: 1, 32>}, {pipeline_mode = #tpu.pipeline_mode<synchronous>, transform_indices = @transform_5, window_bounds = array<i64: 1, 32>}, {pipeline_mode = #tpu.pipeline_mode<synchronous>, transform_indices = @transform_6, window_bounds = array<i64: 1, 32>}, {pipeline_mode = #tpu.pipeline_mode<synchronous>, transform_indices = @transform_7, window_bounds = array<i64: 32, 64>}, {pipeline_mode = #tpu.pipeline_mode<synchronous>, transform_indices = @transform_8, window_bounds = array<i64: 1, 64>}, {pipeline_mode = #tpu.pipeline_mode<synchronous>, transform_indices = @transform_9, window_bounds = array<i64: 64, 32>}, {pipeline_mode = #tpu.pipeline_mode<synchronous>, transform_indices = @transform_10, window_bounds = array<i64: 1, 32>}, {pipeline_mode = #tpu.pipeline_mode<synchronous>, transform_indices = @transform_11, window_bounds = array<i64: 1, 32>}, {pipeline_mode = #tpu.pipeline_mode<synchronous>, transform_indices = @transform_12, window_bounds = array<i64: 1, 32>}, {pipeline_mode = #tpu.pipeline_mode<synchronous>, transform_indices = @transform_13, window_bounds = array<i64: 32, 128>}, {pipeline_mode = #tpu.pipeline_mode<synchronous>, transform_indices = @transform_14, window_bounds = array<i64: 1, 128>}, {pipeline_mode = #tpu.pipeline_mode<synchronous>, transform_indices = @transform_15, window_bounds = array<i64: 1, 128>}]} {
    %c0 = arith.constant 0 : index
    %c0_0 = arith.constant 0 : index
    %0 = vector.load %arg1[%c0, %c0_0] : memref<50x32xf32, #tpu.memory_space<vmem>>, vector<50x32xf32>
    %1 = arith.truncf %0 : vector<50x32xf32> to vector<50x32xbf16>
    %c0_1 = arith.constant 0 : index
    %c0_2 = arith.constant 0 : index
    %2 = vector.load %arg2[%c0_1, %c0_2] : memref<32x96xbf16, #tpu.memory_space<vmem>>, vector<32x96xbf16>
    %cst = arith.constant dense<0.000000e+00> : vector<50x96xf32>
    %3 = tpu.matmul %1, %2, %cst {dimension_numbers = #tpu.dot_dimension_numbers<[1], [0], [0], [1], [0, 0, 1, 1], [], []>} : vector<50x32xbf16>, vector<32x96xbf16>, vector<50x96xf32> -> vector<50x96xf32>
    %c0_3 = arith.constant 0 : index
    %c0_4 = arith.constant 0 : index
    %4 = vector.load %arg3[%c0_3, %c0_4] : memref<1x96xf32, #tpu.memory_space<vmem>>, vector<1x96xf32>
    %5 = vector.broadcast %4 : vector<1x96xf32> to vector<50x96xf32>
    %6 = arith.addf %3, %5 : vector<50x96xf32>
    %c0_5 = arith.constant 0 : index
    %c0_6 = arith.constant 0 : index
    %7 = vector.load %arg4[%c0_5, %c0_6] : memref<32x32xf32, #tpu.memory_space<vmem>>, vector<32x32xf32>
    %cst_7 = arith.constant 0.000000e+00 : f32
    %8 = vector.broadcast %cst_7 : f32 to vector<50x32xf32>
    %9 = vector.extract_strided_slice %6 {offsets = [0, 0], sizes = [50, 8], strides = [1, 1]} : vector<50x96xf32> to vector<50x8xf32>
    %10 = arith.truncf %9 : vector<50x8xf32> to vector<50x8xbf16>
    %11 = vector.extract_strided_slice %6 {offsets = [0, 32], sizes = [50, 8], strides = [1, 1]} : vector<50x96xf32> to vector<50x8xf32>
    %12 = arith.truncf %11 : vector<50x8xf32> to vector<50x8xbf16>
    %13 = vector.extract_strided_slice %6 {offsets = [0, 64], sizes = [50, 8], strides = [1, 1]} : vector<50x96xf32> to vector<50x8xf32>
    %14 = arith.truncf %13 : vector<50x8xf32> to vector<50x8xbf16>
    %cst_8 = arith.constant dense<0.000000e+00> : vector<50x50xf32>
    %15 = tpu.matmul %10, %12, %cst_8 {dimension_numbers = #tpu.dot_dimension_numbers<[1], [1], [0], [0], [0, 0, 1, 0], [], []>} : vector<50x8xbf16>, vector<50x8xbf16>, vector<50x50xf32> -> vector<50x50xf32>
    %cst_9 = arith.constant dense<0xFF800000> : vector<50xf32>
    %16 = vector.multi_reduction <maximumf>, %15, %cst_9 [1] : vector<50x50xf32> to vector<50xf32>
    %17 = vector.shape_cast %16 : vector<50xf32> to vector<50x1xf32>
    %18 = vector.broadcast %17 : vector<50x1xf32> to vector<50x50xf32>
    %19 = arith.subf %15, %18 : vector<50x50xf32>
    %20 = math.exp %19 : vector<50x50xf32>
    %cst_10 = arith.constant dense<0.000000e+00> : vector<50xf32>
    %21 = vector.multi_reduction <add>, %20, %cst_10 [1] : vector<50x50xf32> to vector<50xf32>
    %22 = vector.shape_cast %21 : vector<50xf32> to vector<50x1xf32>
    %23 = tpu.reciprocal %22 {approx = true} : vector<50x1xf32> -> vector<50x1xf32>
    %24 = vector.broadcast %23 : vector<50x1xf32> to vector<50x50xf32>
    %25 = arith.mulf %20, %24 : vector<50x50xf32>
    %26 = arith.truncf %25 : vector<50x50xf32> to vector<50x50xbf16>
    %cst_11 = arith.constant dense<0.000000e+00> : vector<50x8xf32>
    %27 = tpu.matmul %26, %14, %cst_11 {dimension_numbers = #tpu.dot_dimension_numbers<[1], [0], [0], [1], [0, 0, 1, 1], [], []>} : vector<50x50xbf16>, vector<50x8xbf16>, vector<50x8xf32> -> vector<50x8xf32>
    %28 = arith.truncf %27 : vector<50x8xf32> to vector<50x8xbf16>
    %29 = vector.extract_strided_slice %7 {offsets = [0, 0], sizes = [8, 32], strides = [1, 1]} : vector<32x32xf32> to vector<8x32xf32>
    %30 = arith.truncf %29 : vector<8x32xf32> to vector<8x32xbf16>
    %cst_12 = arith.constant dense<0.000000e+00> : vector<50x32xf32>
    %31 = tpu.matmul %28, %30, %cst_12 {dimension_numbers = #tpu.dot_dimension_numbers<[1], [0], [0], [1], [0, 0, 1, 1], [], []>} : vector<50x8xbf16>, vector<8x32xbf16>, vector<50x32xf32> -> vector<50x32xf32>
    %32 = arith.addf %8, %31 : vector<50x32xf32>
    %33 = vector.extract_strided_slice %6 {offsets = [0, 8], sizes = [50, 8], strides = [1, 1]} : vector<50x96xf32> to vector<50x8xf32>
    %34 = arith.truncf %33 : vector<50x8xf32> to vector<50x8xbf16>
    %35 = vector.extract_strided_slice %6 {offsets = [0, 40], sizes = [50, 8], strides = [1, 1]} : vector<50x96xf32> to vector<50x8xf32>
    %36 = arith.truncf %35 : vector<50x8xf32> to vector<50x8xbf16>
    %37 = vector.extract_strided_slice %6 {offsets = [0, 72], sizes = [50, 8], strides = [1, 1]} : vector<50x96xf32> to vector<50x8xf32>
    %38 = arith.truncf %37 : vector<50x8xf32> to vector<50x8xbf16>
    %cst_13 = arith.constant dense<0.000000e+00> : vector<50x50xf32>
    %39 = tpu.matmul %34, %36, %cst_13 {dimension_numbers = #tpu.dot_dimension_numbers<[1], [1], [0], [0], [0, 0, 1, 0], [], []>} : vector<50x8xbf16>, vector<50x8xbf16>, vector<50x50xf32> -> vector<50x50xf32>
    %cst_14 = arith.constant dense<0xFF800000> : vector<50xf32>
    %40 = vector.multi_reduction <maximumf>, %39, %cst_14 [1] : vector<50x50xf32> to vector<50xf32>
    %41 = vector.shape_cast %40 : vector<50xf32> to vector<50x1xf32>
    %42 = vector.broadcast %41 : vector<50x1xf32> to vector<50x50xf32>
    %43 = arith.subf %39, %42 : vector<50x50xf32>
    %44 = math.exp %43 : vector<50x50xf32>
    %cst_15 = arith.constant dense<0.000000e+00> : vector<50xf32>
    %45 = vector.multi_reduction <add>, %44, %cst_15 [1] : vector<50x50xf32> to vector<50xf32>
    %46 = vector.shape_cast %45 : vector<50xf32> to vector<50x1xf32>
    %47 = tpu.reciprocal %46 {approx = true} : vector<50x1xf32> -> vector<50x1xf32>
    %48 = vector.broadcast %47 : vector<50x1xf32> to vector<50x50xf32>
    %49 = arith.mulf %44, %48 : vector<50x50xf32>
    %50 = arith.truncf %49 : vector<50x50xf32> to vector<50x50xbf16>
    %cst_16 = arith.constant dense<0.000000e+00> : vector<50x8xf32>
    %51 = tpu.matmul %50, %38, %cst_16 {dimension_numbers = #tpu.dot_dimension_numbers<[1], [0], [0], [1], [0, 0, 1, 1], [], []>} : vector<50x50xbf16>, vector<50x8xbf16>, vector<50x8xf32> -> vector<50x8xf32>
    %52 = arith.truncf %51 : vector<50x8xf32> to vector<50x8xbf16>
    %53 = vector.extract_strided_slice %7 {offsets = [8, 0], sizes = [8, 32], strides = [1, 1]} : vector<32x32xf32> to vector<8x32xf32>
    %54 = arith.truncf %53 : vector<8x32xf32> to vector<8x32xbf16>
    %cst_17 = arith.constant dense<0.000000e+00> : vector<50x32xf32>
    %55 = tpu.matmul %52, %54, %cst_17 {dimension_numbers = #tpu.dot_dimension_numbers<[1], [0], [0], [1], [0, 0, 1, 1], [], []>} : vector<50x8xbf16>, vector<8x32xbf16>, vector<50x32xf32> -> vector<50x32xf32>
    %56 = arith.addf %32, %55 : vector<50x32xf32>
    %57 = vector.extract_strided_slice %6 {offsets = [0, 16], sizes = [50, 8], strides = [1, 1]} : vector<50x96xf32> to vector<50x8xf32>
    %58 = arith.truncf %57 : vector<50x8xf32> to vector<50x8xbf16>
    %59 = vector.extract_strided_slice %6 {offsets = [0, 48], sizes = [50, 8], strides = [1, 1]} : vector<50x96xf32> to vector<50x8xf32>
    %60 = arith.truncf %59 : vector<50x8xf32> to vector<50x8xbf16>
    %61 = vector.extract_strided_slice %6 {offsets = [0, 80], sizes = [50, 8], strides = [1, 1]} : vector<50x96xf32> to vector<50x8xf32>
    %62 = arith.truncf %61 : vector<50x8xf32> to vector<50x8xbf16>
    %cst_18 = arith.constant dense<0.000000e+00> : vector<50x50xf32>
    %63 = tpu.matmul %58, %60, %cst_18 {dimension_numbers = #tpu.dot_dimension_numbers<[1], [1], [0], [0], [0, 0, 1, 0], [], []>} : vector<50x8xbf16>, vector<50x8xbf16>, vector<50x50xf32> -> vector<50x50xf32>
    %cst_19 = arith.constant dense<0xFF800000> : vector<50xf32>
    %64 = vector.multi_reduction <maximumf>, %63, %cst_19 [1] : vector<50x50xf32> to vector<50xf32>
    %65 = vector.shape_cast %64 : vector<50xf32> to vector<50x1xf32>
    %66 = vector.broadcast %65 : vector<50x1xf32> to vector<50x50xf32>
    %67 = arith.subf %63, %66 : vector<50x50xf32>
    %68 = math.exp %67 : vector<50x50xf32>
    %cst_20 = arith.constant dense<0.000000e+00> : vector<50xf32>
    %69 = vector.multi_reduction <add>, %68, %cst_20 [1] : vector<50x50xf32> to vector<50xf32>
    %70 = vector.shape_cast %69 : vector<50xf32> to vector<50x1xf32>
    %71 = tpu.reciprocal %70 {approx = true} : vector<50x1xf32> -> vector<50x1xf32>
    %72 = vector.broadcast %71 : vector<50x1xf32> to vector<50x50xf32>
    %73 = arith.mulf %68, %72 : vector<50x50xf32>
    %74 = arith.truncf %73 : vector<50x50xf32> to vector<50x50xbf16>
    %cst_21 = arith.constant dense<0.000000e+00> : vector<50x8xf32>
    %75 = tpu.matmul %74, %62, %cst_21 {dimension_numbers = #tpu.dot_dimension_numbers<[1], [0], [0], [1], [0, 0, 1, 1], [], []>} : vector<50x50xbf16>, vector<50x8xbf16>, vector<50x8xf32> -> vector<50x8xf32>
    %76 = arith.truncf %75 : vector<50x8xf32> to vector<50x8xbf16>
    %77 = vector.extract_strided_slice %7 {offsets = [16, 0], sizes = [8, 32], strides = [1, 1]} : vector<32x32xf32> to vector<8x32xf32>
    %78 = arith.truncf %77 : vector<8x32xf32> to vector<8x32xbf16>
    %cst_22 = arith.constant dense<0.000000e+00> : vector<50x32xf32>
    %79 = tpu.matmul %76, %78, %cst_22 {dimension_numbers = #tpu.dot_dimension_numbers<[1], [0], [0], [1], [0, 0, 1, 1], [], []>} : vector<50x8xbf16>, vector<8x32xbf16>, vector<50x32xf32> -> vector<50x32xf32>
    %80 = arith.addf %56, %79 : vector<50x32xf32>
    %81 = vector.extract_strided_slice %6 {offsets = [0, 24], sizes = [50, 8], strides = [1, 1]} : vector<50x96xf32> to vector<50x8xf32>
    %82 = arith.truncf %81 : vector<50x8xf32> to vector<50x8xbf16>
    %83 = vector.extract_strided_slice %6 {offsets = [0, 56], sizes = [50, 8], strides = [1, 1]} : vector<50x96xf32> to vector<50x8xf32>
    %84 = arith.truncf %83 : vector<50x8xf32> to vector<50x8xbf16>
    %85 = vector.extract_strided_slice %6 {offsets = [0, 88], sizes = [50, 8], strides = [1, 1]} : vector<50x96xf32> to vector<50x8xf32>
    %86 = arith.truncf %85 : vector<50x8xf32> to vector<50x8xbf16>
    %cst_23 = arith.constant dense<0.000000e+00> : vector<50x50xf32>
    %87 = tpu.matmul %82, %84, %cst_23 {dimension_numbers = #tpu.dot_dimension_numbers<[1], [1], [0], [0], [0, 0, 1, 0], [], []>} : vector<50x8xbf16>, vector<50x8xbf16>, vector<50x50xf32> -> vector<50x50xf32>
    %cst_24 = arith.constant dense<0xFF800000> : vector<50xf32>
    %88 = vector.multi_reduction <maximumf>, %87, %cst_24 [1] : vector<50x50xf32> to vector<50xf32>
    %89 = vector.shape_cast %88 : vector<50xf32> to vector<50x1xf32>
    %90 = vector.broadcast %89 : vector<50x1xf32> to vector<50x50xf32>
    %91 = arith.subf %87, %90 : vector<50x50xf32>
    %92 = math.exp %91 : vector<50x50xf32>
    %cst_25 = arith.constant dense<0.000000e+00> : vector<50xf32>
    %93 = vector.multi_reduction <add>, %92, %cst_25 [1] : vector<50x50xf32> to vector<50xf32>
    %94 = vector.shape_cast %93 : vector<50xf32> to vector<50x1xf32>
    %95 = tpu.reciprocal %94 {approx = true} : vector<50x1xf32> -> vector<50x1xf32>
    %96 = vector.broadcast %95 : vector<50x1xf32> to vector<50x50xf32>
    %97 = arith.mulf %92, %96 : vector<50x50xf32>
    %98 = arith.truncf %97 : vector<50x50xf32> to vector<50x50xbf16>
    %cst_26 = arith.constant dense<0.000000e+00> : vector<50x8xf32>
    %99 = tpu.matmul %98, %86, %cst_26 {dimension_numbers = #tpu.dot_dimension_numbers<[1], [0], [0], [1], [0, 0, 1, 1], [], []>} : vector<50x50xbf16>, vector<50x8xbf16>, vector<50x8xf32> -> vector<50x8xf32>
    %100 = arith.truncf %99 : vector<50x8xf32> to vector<50x8xbf16>
    %101 = vector.extract_strided_slice %7 {offsets = [24, 0], sizes = [8, 32], strides = [1, 1]} : vector<32x32xf32> to vector<8x32xf32>
    %102 = arith.truncf %101 : vector<8x32xf32> to vector<8x32xbf16>
    %cst_27 = arith.constant dense<0.000000e+00> : vector<50x32xf32>
    %103 = tpu.matmul %100, %102, %cst_27 {dimension_numbers = #tpu.dot_dimension_numbers<[1], [0], [0], [1], [0, 0, 1, 1], [], []>} : vector<50x8xbf16>, vector<8x32xbf16>, vector<50x32xf32> -> vector<50x32xf32>
    %104 = arith.addf %80, %103 : vector<50x32xf32>
    %c0_28 = arith.constant 0 : index
    %c0_29 = arith.constant 0 : index
    %105 = vector.load %arg5[%c0_28, %c0_29] : memref<1x32xf32, #tpu.memory_space<vmem>>, vector<1x32xf32>
    %106 = vector.broadcast %105 : vector<1x32xf32> to vector<50x32xf32>
    %107 = arith.addf %104, %106 : vector<50x32xf32>
    %108 = arith.addf %0, %107 : vector<50x32xf32>
    %c0_30 = arith.constant 0 : index
    %c0_31 = arith.constant 0 : index
    %109 = vector.load %arg6[%c0_30, %c0_31] : memref<1x32xf32, #tpu.memory_space<vmem>>, vector<1x32xf32>
    %c0_32 = arith.constant 0 : index
    %c0_33 = arith.constant 0 : index
    %110 = vector.load %arg7[%c0_32, %c0_33] : memref<1x32xf32, #tpu.memory_space<vmem>>, vector<1x32xf32>
    %cst_34 = arith.constant dense<0.000000e+00> : vector<50xf32>
    %111 = vector.multi_reduction <add>, %108, %cst_34 [1] : vector<50x32xf32> to vector<50xf32>
    %112 = vector.shape_cast %111 : vector<50xf32> to vector<50x1xf32>
    %cst_35 = arith.constant 3.200000e+01 : f32
    %113 = vector.broadcast %cst_35 : f32 to vector<50x1xf32>
    %114 = arith.divf %112, %113 : vector<50x1xf32>
    %115 = vector.broadcast %114 : vector<50x1xf32> to vector<50x32xf32>
    %116 = arith.subf %108, %115 : vector<50x32xf32>
    %117 = arith.mulf %116, %116 : vector<50x32xf32>
    %cst_36 = arith.constant dense<0.000000e+00> : vector<50xf32>
    %118 = vector.multi_reduction <add>, %117, %cst_36 [1] : vector<50x32xf32> to vector<50xf32>
    %119 = vector.shape_cast %118 : vector<50xf32> to vector<50x1xf32>
    %cst_37 = arith.constant 3.200000e+01 : f32
    %120 = vector.broadcast %cst_37 : f32 to vector<50x1xf32>
    %121 = arith.divf %119, %120 : vector<50x1xf32>
    %122 = vector.broadcast %114 : vector<50x1xf32> to vector<50x32xf32>
    %123 = arith.subf %108, %122 : vector<50x32xf32>
    %cst_38 = arith.constant 9.99999974E-6 : f32
    %124 = vector.broadcast %cst_38 : f32 to vector<50x1xf32>
    %125 = arith.addf %121, %124 : vector<50x1xf32>
    %126 = math.rsqrt %125 : vector<50x1xf32>
    %127 = vector.broadcast %126 : vector<50x1xf32> to vector<50x32xf32>
    %128 = arith.mulf %123, %127 : vector<50x32xf32>
    %129 = vector.broadcast %109 : vector<1x32xf32> to vector<50x32xf32>
    %130 = arith.mulf %128, %129 : vector<50x32xf32>
    %131 = vector.broadcast %110 : vector<1x32xf32> to vector<50x32xf32>
    %132 = arith.addf %130, %131 : vector<50x32xf32>
    %133 = arith.truncf %132 : vector<50x32xf32> to vector<50x32xbf16>
    %c0_39 = arith.constant 0 : index
    %c0_40 = arith.constant 0 : index
    %134 = vector.load %arg8[%c0_39, %c0_40] : memref<32x64xbf16, #tpu.memory_space<vmem>>, vector<32x64xbf16>
    %cst_41 = arith.constant dense<0.000000e+00> : vector<50x64xf32>
    %135 = tpu.matmul %133, %134, %cst_41 {dimension_numbers = #tpu.dot_dimension_numbers<[1], [0], [0], [1], [0, 0, 1, 1], [], []>} : vector<50x32xbf16>, vector<32x64xbf16>, vector<50x64xf32> -> vector<50x64xf32>
    %c0_42 = arith.constant 0 : index
    %c0_43 = arith.constant 0 : index
    %136 = vector.load %arg9[%c0_42, %c0_43] : memref<1x64xf32, #tpu.memory_space<vmem>>, vector<1x64xf32>
    %137 = vector.broadcast %136 : vector<1x64xf32> to vector<50x64xf32>
    %138 = arith.addf %135, %137 : vector<50x64xf32>
    %cst_44 = arith.constant 0.000000e+00 : f32
    %139 = vector.broadcast %cst_44 : f32 to vector<50x64xf32>
    %140 = arith.maximumf %138, %139 : vector<50x64xf32>
    %141 = arith.truncf %140 : vector<50x64xf32> to vector<50x64xbf16>
    %c0_45 = arith.constant 0 : index
    %c0_46 = arith.constant 0 : index
    %142 = vector.load %arg10[%c0_45, %c0_46] : memref<64x32xbf16, #tpu.memory_space<vmem>>, vector<64x32xbf16>
    %cst_47 = arith.constant dense<0.000000e+00> : vector<50x32xf32>
    %143 = tpu.matmul %141, %142, %cst_47 {dimension_numbers = #tpu.dot_dimension_numbers<[1], [0], [0], [1], [0, 0, 1, 1], [], []>} : vector<50x64xbf16>, vector<64x32xbf16>, vector<50x32xf32> -> vector<50x32xf32>
    %c0_48 = arith.constant 0 : index
    %c0_49 = arith.constant 0 : index
    %144 = vector.load %arg11[%c0_48, %c0_49] : memref<1x32xf32, #tpu.memory_space<vmem>>, vector<1x32xf32>
    %145 = vector.broadcast %144 : vector<1x32xf32> to vector<50x32xf32>
    %146 = arith.addf %143, %145 : vector<50x32xf32>
    %147 = arith.addf %132, %146 : vector<50x32xf32>
    %c0_50 = arith.constant 0 : index
    %c0_51 = arith.constant 0 : index
    %148 = vector.load %arg12[%c0_50, %c0_51] : memref<1x32xf32, #tpu.memory_space<vmem>>, vector<1x32xf32>
    %c0_52 = arith.constant 0 : index
    %c0_53 = arith.constant 0 : index
    %149 = vector.load %arg13[%c0_52, %c0_53] : memref<1x32xf32, #tpu.memory_space<vmem>>, vector<1x32xf32>
    %cst_54 = arith.constant dense<0.000000e+00> : vector<50xf32>
    %150 = vector.multi_reduction <add>, %147, %cst_54 [1] : vector<50x32xf32> to vector<50xf32>
    %151 = vector.shape_cast %150 : vector<50xf32> to vector<50x1xf32>
    %cst_55 = arith.constant 3.200000e+01 : f32
    %152 = vector.broadcast %cst_55 : f32 to vector<50x1xf32>
    %153 = arith.divf %151, %152 : vector<50x1xf32>
    %154 = vector.broadcast %153 : vector<50x1xf32> to vector<50x32xf32>
    %155 = arith.subf %147, %154 : vector<50x32xf32>
    %156 = arith.mulf %155, %155 : vector<50x32xf32>
    %cst_56 = arith.constant dense<0.000000e+00> : vector<50xf32>
    %157 = vector.multi_reduction <add>, %156, %cst_56 [1] : vector<50x32xf32> to vector<50xf32>
    %158 = vector.shape_cast %157 : vector<50xf32> to vector<50x1xf32>
    %cst_57 = arith.constant 3.200000e+01 : f32
    %159 = vector.broadcast %cst_57 : f32 to vector<50x1xf32>
    %160 = arith.divf %158, %159 : vector<50x1xf32>
    %161 = vector.broadcast %153 : vector<50x1xf32> to vector<50x32xf32>
    %162 = arith.subf %147, %161 : vector<50x32xf32>
    %cst_58 = arith.constant 9.99999974E-6 : f32
    %163 = vector.broadcast %cst_58 : f32 to vector<50x1xf32>
    %164 = arith.addf %160, %163 : vector<50x1xf32>
    %165 = math.rsqrt %164 : vector<50x1xf32>
    %166 = vector.broadcast %165 : vector<50x1xf32> to vector<50x32xf32>
    %167 = arith.mulf %162, %166 : vector<50x32xf32>
    %168 = vector.broadcast %148 : vector<1x32xf32> to vector<50x32xf32>
    %169 = arith.mulf %167, %168 : vector<50x32xf32>
    %170 = vector.broadcast %149 : vector<1x32xf32> to vector<50x32xf32>
    %171 = arith.addf %169, %170 : vector<50x32xf32>
    %cst_59 = arith.constant dense<0.000000e+00> : vector<32xf32>
    %172 = vector.multi_reduction <add>, %171, %cst_59 [0] : vector<50x32xf32> to vector<32xf32>
    %173 = vector.shape_cast %172 : vector<32xf32> to vector<1x32xf32>
    %174 = vector.extract_strided_slice %171 {offsets = [0, 0], sizes = [1, 32], strides = [1, 1]} : vector<50x32xf32> to vector<1x32xf32>
    %175 = arith.subf %173, %174 : vector<1x32xf32>
    %cst_60 = arith.constant 0.0204081628 : f32
    %176 = vector.broadcast %cst_60 : f32 to vector<1x32xf32>
    %177 = arith.mulf %175, %176 : vector<1x32xf32>
    %178 = arith.truncf %177 : vector<1x32xf32> to vector<1x32xbf16>
    %c0_61 = arith.constant 0 : index
    %c0_62 = arith.constant 0 : index
    %179 = vector.load %arg14[%c0_61, %c0_62] : memref<32x128xbf16, #tpu.memory_space<vmem>>, vector<32x128xbf16>
    %cst_63 = arith.constant dense<0.000000e+00> : vector<1x128xf32>
    %180 = tpu.matmul %178, %179, %cst_63 {dimension_numbers = #tpu.dot_dimension_numbers<[1], [0], [0], [1], [0, 0, 1, 1], [], []>} : vector<1x32xbf16>, vector<32x128xbf16>, vector<1x128xf32> -> vector<1x128xf32>
    %c0_64 = arith.constant 0 : index
    %c0_65 = arith.constant 0 : index
    %181 = vector.load %arg15[%c0_64, %c0_65] : memref<1x128xf32, #tpu.memory_space<vmem>>, vector<1x128xf32>
    %182 = arith.addf %180, %181 : vector<1x128xf32>
    %c0_66 = arith.constant 0 : index
    %c0_67 = arith.constant 0 : index
    %183 = vector.load %arg16[%c0_66, %c0_67] : memref<1x128xf32, #tpu.memory_space<vmem>>, vector<1x128xf32>
    tpu.vector_store %arg16[%c0_66, %c0_67], %182 {strides = array<i32>} : memref<1x128xf32, #tpu.memory_space<vmem>>, vector<1x128xf32>,
    return
  }
  func.func @transform_0(%arg0: i32) -> (i32, i32) {
    %c0_i32 = arith.constant 0 : i32
    %c0_i32_0 = arith.constant 0 : i32
    %c0_i32_1 = arith.constant 0 : i32
    return %c0_i32, %c0_i32_0 : i32, i32
  }
  func.func @transform_1(%arg0: i32) -> (i32, i32) {
    %c0_i32 = arith.constant 0 : i32
    %c0_i32_0 = arith.constant 0 : i32
    %c0_i32_1 = arith.constant 0 : i32
    return %c0_i32, %c0_i32_0 : i32, i32
  }
  func.func @transform_2(%arg0: i32) -> (i32, i32) {
    %c0_i32 = arith.constant 0 : i32
    %c0_i32_0 = arith.constant 0 : i32
    %c0_i32_1 = arith.constant 0 : i32
    return %c0_i32, %c0_i32_0 : i32, i32
  }
  func.func @transform_3(%arg0: i32) -> (i32, i32) {
    %c0_i32 = arith.constant 0 : i32
    %c0_i32_0 = arith.constant 0 : i32
    %c0_i32_1 = arith.constant 0 : i32
    return %c0_i32, %c0_i32_0 : i32, i32
  }
  func.func @transform_4(%arg0: i32) -> (i32, i32) {
    %c0_i32 = arith.constant 0 : i32
    %c0_i32_0 = arith.constant 0 : i32
    %c0_i32_1 = arith.constant 0 : i32
    return %c0_i32, %c0_i32_0 : i32, i32
  }
  func.func @transform_5(%arg0: i32) -> (i32, i32) {
    %c0_i32 = arith.constant 0 : i32
    %c0_i32_0 = arith.constant 0 : i32
    %c0_i32_1 = arith.constant 0 : i32
    return %c0_i32, %c0_i32_0 : i32, i32
  }
  func.func @transform_6(%arg0: i32) -> (i32, i32) {
    %c0_i32 = arith.constant 0 : i32
    %c0_i32_0 = arith.constant 0 : i32
    %c0_i32_1 = arith.constant 0 : i32
    return %c0_i32, %c0_i32_0 : i32, i32
  }
  func.func @transform_7(%arg0: i32) -> (i32, i32) {
    %c0_i32 = arith.constant 0 : i32
    %c0_i32_0 = arith.constant 0 : i32
    %c0_i32_1 = arith.constant 0 : i32
    return %c0_i32, %c0_i32_0 : i32, i32
  }
  func.func @transform_8(%arg0: i32) -> (i32, i32) {
    %c0_i32 = arith.constant 0 : i32
    %c0_i32_0 = arith.constant 0 : i32
    %c0_i32_1 = arith.constant 0 : i32
    return %c0_i32, %c0_i32_0 : i32, i32
  }
  func.func @transform_9(%arg0: i32) -> (i32, i32) {
    %c0_i32 = arith.constant 0 : i32
    %c0_i32_0 = arith.constant 0 : i32
    %c0_i32_1 = arith.constant 0 : i32
    return %c0_i32, %c0_i32_0 : i32, i32
  }
  func.func @transform_10(%arg0: i32) -> (i32, i32) {
    %c0_i32 = arith.constant 0 : i32
    %c0_i32_0 = arith.constant 0 : i32
    %c0_i32_1 = arith.constant 0 : i32
    return %c0_i32, %c0_i32_0 : i32, i32
  }
  func.func @transform_11(%arg0: i32) -> (i32, i32) {
    %c0_i32 = arith.constant 0 : i32
    %c0_i32_0 = arith.constant 0 : i32
    %c0_i32_1 = arith.constant 0 : i32
    return %c0_i32, %c0_i32_0 : i32, i32
  }
  func.func @transform_12(%arg0: i32) -> (i32, i32) {
    %c0_i32 = arith.constant 0 : i32
    %c0_i32_0 = arith.constant 0 : i32
    %c0_i32_1 = arith.constant 0 : i32
    return %c0_i32, %c0_i32_0 : i32, i32
  }
  func.func @transform_13(%arg0: i32) -> (i32, i32) {
    %c0_i32 = arith.constant 0 : i32
    %c0_i32_0 = arith.constant 0 : i32
    %c0_i32_1 = arith.constant 0 : i32
    return %c0_i32, %c0_i32_0 : i32, i32
  }
  func.func @transform_14(%arg0: i32) -> (i32, i32) {
    %c0_i32 = arith.constant 0 : i32
    %c0_i32_0 = arith.constant 0 : i32
    %c0_i32_1 = arith.constant 0 : i32
    return %c0_i32, %c0_i32_0 : i32, i32
  }
  func.func @transform_15(%arg0: i32) -> (i32, i32) {
    %c0_i32 = arith.constant 0 : i32
    %c0_i32_0 = arith.constant 0 : i32
    %c0_i32_1 = arith.constant 0 : i32
    return %c0_i32, %c0_i32_0 : i32, i32
  }
}

</mosaic_0001>

<llo_original>
// kernel: vit_forward.1
$region0: #{vit_forward.1}
  #allocation0 [shape = 'u32[]', space=smem, size = 0x4, offset = 0x4, fixed_abs, tag = 'smem constant byte address 0x4 - core index']
  #allocation1 [shape = 'u32[144,128]{1,0:T(1,128)}', space=vmem, size = 0x12000, scoped, tag = 'internal scratch']
  %s0 = inlined_call_operand.vmem [shape: f32[50,32], index: 0, kind: input, shape index: {}]
  %s1 = inlined_call_operand.vmem [shape: bf16[32,96], index: 1, kind: input, shape index: {}]
  %s2 = inlined_call_operand.vmem [shape: f32[1,96], index: 2, kind: input, shape index: {}]
  %s3 = inlined_call_operand.vmem [shape: f32[32,32], index: 3, kind: input, shape index: {}]
  %s4 = inlined_call_operand.vmem [shape: f32[1,32], index: 4, kind: input, shape index: {}]
  %s5 = inlined_call_operand.vmem [shape: f32[1,32], index: 5, kind: input, shape index: {}]
  %s6 = inlined_call_operand.vmem [shape: f32[1,32], index: 6, kind: input, shape index: {}]
  %s7 = inlined_call_operand.vmem [shape: bf16[32,64], index: 7, kind: input, shape index: {}]
  %s8 = inlined_call_operand.vmem [shape: f32[1,64], index: 8, kind: input, shape index: {}]
  %s9 = inlined_call_operand.vmem [shape: bf16[64,32], index: 9, kind: input, shape index: {}]
  %s10 = inlined_call_operand.vmem [shape: f32[1,32], index: 10, kind: input, shape index: {}]
  %s11 = inlined_call_operand.vmem [shape: f32[1,32], index: 11, kind: input, shape index: {}]
  %s12 = inlined_call_operand.vmem [shape: f32[1,32], index: 12, kind: input, shape index: {}]
  %s13 = inlined_call_operand.vmem [shape: bf16[32,128], index: 13, kind: input, shape index: {}]
  %s14 = inlined_call_operand.vmem [shape: f32[1,128], index: 14, kind: input, shape index: {}]
  %s15 = inlined_call_operand.hbm [shape: f32[1,128], index: 15, kind: output, shape index: {}]
  %s16 = sld [smem:[#allocation0]]
  $region70: #{vit_forward.1} parent=0
    _
  %s18 = ssub.s32 1, %s16
  %s19 = scalar_select 0, %s18, %s16
  $region1: #{vit_forward.1} parent=0
    #allocation2 [shape = 'u8[512]{0}', space=vmem, size = 0x400, scoped, tag = 'output window, operand 0, single buffered']
    #allocation3 [shape = 's32[1]{0}', space=sflag, size = 0x4, scoped, tag = 'scoped memory for vit_forward.1']
    %20 = vsyncpa [#allocation3], 0
    // Predicated region
    $region2: #{vit_forward.1} parent=1 // pred_check
      _
    $region3: #{vit_forward.1} parent=1 // pred_check_branch
      %22 = sbr.rel (0) target = $region5
    $region4: #{vit_forward.1} parent=1 // pred_region
      _
    $region5: #{vit_forward.1} parent=1 // pred_fallthru
      _
    // Predicated region
    $region6: #{vit_forward.1} parent=1 // pred_check
      _
    $region7: #{vit_forward.1} parent=1 // pred_check_branch
      %24 = sbr.rel (0) target = $region9
    $region8: #{vit_forward.1} parent=1 // pred_region
      _
    $region9: #{vit_forward.1} parent=1 // pred_fallthru
      _
    // Predicated region
    $region10: #{vit_forward.1} parent=1 // pred_check
      _
    $region11: #{vit_forward.1} parent=1 // pred_check_branch
      %26 = sbr.rel (0) target = $region13
    $region12: #{vit_forward.1} parent=1 // pred_region
      _
    $region13: #{vit_forward.1} parent=1 // pred_fallthru
      _
    // Predicated region
    $region14: #{vit_forward.1} parent=1 // pred_check
      _
    $region15: #{vit_forward.1} parent=1 // pred_check_branch
      %28 = sbr.rel (0) target = $region17
    $region16: #{vit_forward.1} parent=1 // pred_region
      _
    $region17: #{vit_forward.1} parent=1 // pred_fallthru
      _
    // Predicated region
    $region18: #{vit_forward.1} parent=1 // pred_check
      _
    $region19: #{vit_forward.1} parent=1 // pred_check_branch
      %30 = sbr.rel (0) target = $region21
    $region20: #{vit_forward.1} parent=1 // pred_region
      _
    $region21: #{vit_forward.1} parent=1 // pred_fallthru
      _
    // Predicated region
    $region22: #{vit_forward.1} parent=1 // pred_check
      _
    $region23: #{vit_forward.1} parent=1 // pred_check_branch
      %32 = sbr.rel (0) target = $region25
    $region24: #{vit_forward.1} parent=1 // pred_region
      _
    $region25: #{vit_forward.1} parent=1 // pred_fallthru
      _
    // Predicated region
    $region26: #{vit_forward.1} parent=1 // pred_check
      _
    $region27: #{vit_forward.1} parent=1 // pred_check_branch
      %34 = sbr.rel (0) target = $region29
    $region28: #{vit_forward.1} parent=1 // pred_region
      _
    $region29: #{vit_forward.1} parent=1 // pred_fallthru
      _
    // Predicated region
    $region30: #{vit_forward.1} parent=1 // pred_check
      _
    $region31: #{vit_forward.1} parent=1 // pred_check_branch
      %36 = sbr.rel (0) target = $region33
    $region32: #{vit_forward.1} parent=1 // pred_region
      _
    $region33: #{vit_forward.1} parent=1 // pred_fallthru
      _
    // Predicated region
    $region34: #{vit_forward.1} parent=1 // pred_check
      _
    $region35: #{vit_forward.1} parent=1 // pred_check_branch
      %38 = sbr.rel (0) target = $region37
    $region36: #{vit_forward.1} parent=1 // pred_region
      _
    $region37: #{vit_forward.1} parent=1 // pred_fallthru
      _
    // Predicated region
    $region38: #{vit_forward.1} parent=1 // pred_check
      _
    $region39: #{vit_forward.1} parent=1 // pred_check_branch
      %40 = sbr.rel (0) target = $region41
    $region40: #{vit_forward.1} parent=1 // pred_region
      _
    $region41: #{vit_forward.1} parent=1 // pred_fallthru
      _
    // Predicated region
    $region42: #{vit_forward.1} parent=1 // pred_check
      _
    $region43: #{vit_forward.1} parent=1 // pred_check_branch
      %42 = sbr.rel (0) target = $region45
    $region44: #{vit_forward.1} parent=1 // pred_region
      _
    $region45: #{vit_forward.1} parent=1 // pred_fallthru
      _
    // Predicated region
    $region46: #{vit_forward.1} parent=1 // pred_check
      _
    $region47: #{vit_forward.1} parent=1 // pred_check_branch
      %44 = sbr.rel (0) target = $region49
    $region48: #{vit_forward.1} parent=1 // pred_region
      _
    $region49: #{vit_forward.1} parent=1 // pred_fallthru
      _
    // Predicated region
    $region50: #{vit_forward.1} parent=1 // pred_check
      _
    $region51: #{vit_forward.1} parent=1 // pred_check_branch
      %46 = sbr.rel (0) target = $region53
    $region52: #{vit_forward.1} parent=1 // pred_region
      _
    $region53: #{vit_forward.1} parent=1 // pred_fallthru
      _
    // Predicated region
    $region54: #{vit_forward.1} parent=1 // pred_check
      _
    $region55: #{vit_forward.1} parent=1 // pred_check_branch
      %48 = sbr.rel (0) target = $region57
    $region56: #{vit_forward.1} parent=1 // pred_region
      _
    $region57: #{vit_forward.1} parent=1 // pred_fallthru
      _
    // Predicated region
    $region58: #{vit_forward.1} parent=1 // pred_check
      _
    $region59: #{vit_forward.1} parent=1 // pred_check_branch
      %50 = sbr.rel (0) target = $region61
    $region60: #{vit_forward.1} parent=1 // pred_region
      _
    $region61: #{vit_forward.1} parent=1 // pred_fallthru
      _
    %v52 = vld [vmem:[%s0] sm:$0xff]
    %v53 = vld [vmem:[%s0 + $0x8] sm:$0xff]
    %v54 = vld [vmem:[%s0 + $0x10] sm:$0xff]
    %v55 = vld [vmem:[%s0 + $0x18] sm:$0xff]
    %v56 = vld [vmem:[%s0 + $0x20] sm:$0xff]
    %v57 = vld [vmem:[%s0 + $0x28] sm:$0xff]
    %v58 = vld [vmem:[%s0 + $0x30] sm:$0x3]
    %v59 = vpack.c.bf16 %v53, %v52
    %v60 = vpack.c.bf16 %v55, %v54
    %v61 = vpack.c.bf16 %v57, %v56
    %v62 = vpack.c.bf16 %v58, %v58
    %v63 = vld [vmem:[%s1] sm:$0xf]
    %v64 = vld [vmem:[%s1 + $0x4] sm:$0xf]
    %v65 = vld [vmem:[%s1 + $0x8] sm:$0xf]
    %v66 = vld [vmem:[%s1 + $0xc] sm:$0xf]
    %v67 = vld [vmem:[%s2] sm:$0x1]
    %v69 = vlaneseq
    %v70 = vshrl.u32 %v69, 7
    %v71 = vsub.s32 0, %v70
    %v72 = vrot.slane %v67, %v71
    %v78 = vunpack.c.l.b16 %v63
    %v79 = vunpack.c.l.b16 %v64
    %v80 = vunpack.c.l.b16 %v65
    %v81 = vunpack.c.l.b16 %v66
    %v82 = vpack.c.b16 %v79, %v78
    %v83 = vpack.c.b16 %v81, %v80
    %vm86 = vcmask 261120
    %v88 = vsel %vm86, %v59, 0
    %v91 = vsel %vm86, %v60, 0
    %v94 = vsel %vm86, %v61, 0
    %v97 = vsel %vm86, %v62, 0
    %99 = vmatprep.subr.bf16.mxu0 0
    %100 = vmatpush1.bf16.msra.mxu0 %v82
    %101 = vmatprep.subr.bf16.mxu0 0
    %102 = vmatpush1.bf16.msra.mxu0 %v83
    %103 = vmatprep.subr.bf16.mxu0 0
    %104 = vmatpush1.bf16.msra.mxu0 0
    %105 = vmatprep.subr.bf16.mxu0 0
    %106 = vmatpush1.bf16.msra.mxu0 0
    %107 = vmatprep.subr.bf16.mxu0 0
    %108 = vmatpush1.bf16.msra.mxu0 0
    %109 = vmatprep.subr.bf16.mxu0 0
    %110 = vmatpush1.bf16.msra.mxu0 0
    %111 = vmatprep.subr.bf16.mxu0 0
    %112 = vmatpush1.bf16.msra.mxu0 0
    %113 = vmatprep.subr.bf16.mxu0 0
    %114 = vmatpush1.bf16.msra.mxu0 0
    %115 = vmatprep.subr.bf16.mxu0 0
    %116 = vmatpush1.bf16.msra.mxu0 0
    %117 = vmatprep.subr.bf16.mxu0 0
    %118 = vmatpush1.bf16.msra.mxu0 0
    %119 = vmatprep.subr.bf16.mxu0 0
    %120 = vmatpush1.bf16.msra.mxu0 0
    %121 = vmatprep.subr.bf16.mxu0 0
    %122 = vmatpush1.bf16.msra.mxu0 0
    %123 = vmatprep.subr.bf16.mxu0 0
    %124 = vmatpush1.bf16.msra.mxu0 0
    %125 = vmatprep.subr.bf16.mxu0 0
    %126 = vmatpush1.bf16.msra.mxu0 0
    %127 = vmatprep.subr.bf16.mxu0 0
    %128 = vmatpush1.bf16.msra.mxu0 0
    %129 = vmatprep.subr.bf16.mxu0 0
    %130 = vmatpush1.bf16.msra.mxu0 0
    %131 = vmatprep.mubr.bf16.mxu0 0
    %132 = vmatmul.mubr.bf16.gmra.mrb[0].mxu0 %v88
    %v133 = vpop.f32.mrb[0].mxu0
    %v134 = vadd.f32 %v72, %v133
    %v135 = vpop.f32.mrb[0].mxu0
    %v136 = vpop.f32.mrb[0].mxu0
    %v137 = vadd.f32 %v72, %v136
    %v138 = vpop.f32.mrb[0].mxu0
    %139 = vmatprep.mubr.bf16.mxu0 0
    %140 = vmatmul.mubr.bf16.gmra.mrb[0].mxu0 %v91
    %v141 = vpop.f32.mrb[0].mxu0
    %v142 = vadd.f32 %v72, %v141
    %v143 = vpop.f32.mrb[0].mxu0
    %v144 = vpop.f32.mrb[0].mxu0
    %v145 = vadd.f32 %v72, %v144
    %v146 = vpop.f32.mrb[0].mxu0
    %147 = vmatprep.mubr.bf16.mxu0 0
    %148 = vmatmul.mubr.bf16.gmra.mrb[0].mxu0 %v94
    %v149 = vpop.f32.mrb[0].mxu0
    %v150 = vadd.f32 %v72, %v149
    %v151 = vpop.f32.mrb[0].mxu0
    %v152 = vpop.f32.mrb[0].mxu0
    %v153 = vadd.f32 %v72, %v152
    %v154 = vpop.f32.mrb[0].mxu0
    %155 = vmatprep.mubr.bf16.mxu0 0
    %156 = vmatmul.mubr.bf16.gmra.mrb[0].mxu0 %v97
    %v157 = vpop.f32.mrb[0].mxu0
    %v158 = vadd.f32 %v72, %v157
    %v159 = vpop.f32.mrb[0].mxu0
    %v160 = vpop.f32.mrb[0].mxu0
    %v161 = vpop.f32.mrb[0].mxu0
    %162 = vdwg.mxu0
    %v163 = vld [vmem:[%s3] sm:$0xff]
    %v164 = vld [vmem:[%s3 + $0x8] sm:$0xff]
    %v165 = vld [vmem:[%s3 + $0x10] sm:$0xff]
    %v166 = vld [vmem:[%s3 + $0x18] sm:$0xff]
    %v167 = vpack.c.bf16 %v137, %v134
    %v168 = vpack.c.bf16 %v145, %v142
    %v169 = vpack.c.bf16 %v153, %v150
    %v170 = vpack.c.bf16 %v158, %v158
    %175 = vrot.lane.b32.xlu0 %v167, 96
    %v176 = vpop.permute.xlu0 %175
    %177 = vrot.lane.b32.xlu0 %v168, 96
    %v178 = vpop.permute.xlu0 %177
    %179 = vrot.lane.b32.xlu0 %v169, 96
    %v180 = vpop.permute.xlu0 %179
    %181 = vrot.lane.b32.xlu0 %v170, 96
    %v182 = vpop.permute.xlu0 %181
    %vm183 = vcmask 64512
    %v185 = vsel %vm183, %v167, 0
    %v188 = vsel %vm183, %v168, 0
    %v191 = vsel %vm183, %v169, 0
    %v194 = vsel %vm183, %v170, 0
    %v197 = vsel %vm183, %v176, 0
    %v200 = vsel %vm183, %v178, 0
    %v203 = vsel %vm183, %v180, 0
    %v206 = vsel %vm183, %v182, 0
    %208 = vmatprep.subr.bf16.mxu0 0
    %209 = vmatpush1.bf16.xpose.msra.mxu0 %v197
    %210 = vmatprep.subr.bf16.mxu0 0
    %211 = vmatpush1.bf16.xpose.msra.mxu0 %v200
    %212 = vmatprep.subr.bf16.mxu0 0
    %213 = vmatpush1.bf16.xpose.msra.mxu0 %v203
    %214 = vmatprep.subr.bf16.mxu0 0
    %215 = vmatpush1.bf16.xpose.msra.mxu0 %v206
    %216 = vmatprep.subr.bf16.mxu0 0
    %217 = vmatpush1.bf16.xpose.msra.mxu0 0
    %218 = vmatprep.subr.bf16.mxu0 0
    %219 = vmatpush1.bf16.xpose.msra.mxu0 0
    %220 = vmatprep.subr.bf16.mxu0 0
    %221 = vmatpush1.bf16.xpose.msra.mxu0 0
    %222 = vmatprep.subr.bf16.mxu0 0
    %223 = vmatpush1.bf16.xpose.msra.mxu0 0
    %224 = vmatprep.subr.bf16.mxu0 0
    %225 = vmatpush1.bf16.xpose.msra.mxu0 0
    %226 = vmatprep.subr.bf16.mxu0 0
    %227 = vmatpush1.bf16.xpose.msra.mxu0 0
    %228 = vmatprep.subr.bf16.mxu0 0
    %229 = vmatpush1.bf16.xpose.msra.mxu0 0
    %230 = vmatprep.subr.bf16.mxu0 0
    %231 = vmatpush1.bf16.xpose.msra.mxu0 0
    %232 = vmatprep.subr.bf16.mxu0 0
    %233 = vmatpush1.bf16.xpose.msra.mxu0 0
    %234 = vmatprep.subr.bf16.mxu0 0
    %235 = vmatpush1.bf16.xpose.msra.mxu0 0
    %236 = vmatprep.subr.bf16.mxu0 0
    %237 = vmatpush1.bf16.xpose.msra.mxu0 0
    %238 = vmatprep.subr.bf16.mxu0 0
    %239 = vmatpush1.bf16.xpose.msra.mxu0 0
    %240 = vmatprep.mubr.bf16.mxu0 0
    %241 = vmatmul.mubr.bf16.gmra.mrb[0].mxu0 %v185
    %v242 = vpop.f32.mrb[0].mxu0
    %v243 = vadd.f32 0.0, %v242
    %v244 = vpop.f32.mrb[0].mxu0
    %v245 = vpop.f32.mrb[0].mxu0
    %v246 = vadd.f32 0.0, %v245
    %v247 = vpop.f32.mrb[0].mxu0
    %248 = vmatprep.mubr.bf16.mxu0 0
    %249 = vmatmul.mubr.bf16.gmra.mrb[0].mxu0 %v188
    %v250 = vpop.f32.mrb[0].mxu0
    %v251 = vadd.f32 0.0, %v250
    %v252 = vpop.f32.mrb[0].mxu0
    %v253 = vpop.f32.mrb[0].mxu0
    %v254 = vadd.f32 0.0, %v253
    %v255 = vpop.f32.mrb[0].mxu0
    %256 = vmatprep.mubr.bf16.mxu0 0
    %257 = vmatmul.mubr.bf16.gmra.mrb[0].mxu0 %v191
    %v258 = vpop.f32.mrb[0].mxu0
    %v259 = vadd.f32 0.0, %v258
    %v260 = vpop.f32.mrb[0].mxu0
    %v261 = vpop.f32.mrb[0].mxu0
    %v262 = vadd.f32 0.0, %v261
    %v263 = vpop.f32.mrb[0].mxu0
    %264 = vmatprep.mubr.bf16.mxu0 0
    %265 = vmatmul.mubr.bf16.gmra.mrb[0].mxu0 %v194
    %v266 = vpop.f32.mrb[0].mxu0
    %v267 = vadd.f32 0.0, %v266
    %v268 = vpop.f32.mrb[0].mxu0
    %v269 = vpop.f32.mrb[0].mxu0
    %v270 = vpop.f32.mrb[0].mxu0
    %271 = vdwg.mxu0
    %vm272 = vcmask 408576
    %v273 = vsel %vm272, %v243, -inf
    %274 = vmax.xlane.f32.xlu0 %v273
    %v275 = vpop.xlane.xlu0 %274
    %v276 = vsel %vm272, %v246, -inf
    %277 = vmax.xlane.f32.xlu0 %v276
    %v278 = vpop.xlane.xlu0 %277
    %v279 = vsel %vm272, %v251, -inf
    %280 = vmax.xlane.f32.xlu0 %v279
    %v281 = vpop.xlane.xlu0 %280
    %v282 = vsel %vm272, %v254, -inf
    %283 = vmax.xlane.f32.xlu0 %v282
    %v284 = vpop.xlane.xlu0 %283
    %v285 = vsel %vm272, %v259, -inf
    %286 = vmax.xlane.f32.xlu0 %v285
    %v287 = vpop.xlane.xlu0 %286
    %v288 = vsel %vm272, %v262, -inf
    %289 = vmax.xlane.f32.xlu0 %v288
    %v290 = vpop.xlane.xlu0 %289
    %vm291 = vcmask 402432
    %v292 = vsel %vm291, %v267, -inf
    %293 = vmax.xlane.f32.xlu0 %v292
    %v294 = vpop.xlane.xlu0 %293
    %v295 = vsub.f32 %v243, %v275
    %v296 = vsub.f32 %v246, %v278
    %v297 = vsub.f32 %v251, %v281
    %v298 = vsub.f32 %v254, %v284
    %v299 = vsub.f32 %v259, %v287
    %v300 = vsub.f32 %v262, %v290
    %v301 = vsub.f32 %v267, %v294
    %v302 = vmul.f32 %v295, 1.442695
    %v303 = vpow.pop %v302
    %v304 = vmul.f32 %v296, 1.442695
    %v305 = vpow.pop %v304
    %v306 = vmul.f32 %v297, 1.442695
    %v307 = vpow.pop %v306
    %v308 = vmul.f32 %v298, 1.442695
    %v309 = vpow.pop %v308
    %v310 = vmul.f32 %v299, 1.442695
    %v311 = vpow.pop %v310
    %v312 = vmul.f32 %v300, 1.442695
    %v313 = vpow.pop %v312
    %v314 = vmul.f32 %v301, 1.442695
    %v315 = vpow.pop %v314
    %v316 = vsel %vm272, %v303, 0.0
    %317 = vadd.xlane.f32.xlu0 %v316
    %v318 = vpop.xlane.xlu0 %317
    %v319 = vsel %vm272, %v305, 0.0
    %320 = vadd.xlane.f32.xlu0 %v319
    %v321 = vpop.xlane.xlu0 %320
    %v322 = vsel %vm272, %v307, 0.0
    %323 = vadd.xlane.f32.xlu0 %v322
    %v324 = vpop.xlane.xlu0 %323
    %v325 = vsel %vm272, %v309, 0.0
    %326 = vadd.xlane.f32.xlu0 %v325
    %v327 = vpop.xlane.xlu0 %326
    %v328 = vsel %vm272, %v311, 0.0
    %329 = vadd.xlane.f32.xlu0 %v328
    %v330 = vpop.xlane.xlu0 %329
    %v331 = vsel %vm272, %v313, 0.0
    %332 = vadd.xlane.f32.xlu0 %v331
    %v333 = vpop.xlane.xlu0 %332
    %v334 = vsel %vm291, %v315, 0.0
    %335 = vadd.xlane.f32.xlu0 %v334
    %v336 = vpop.xlane.xlu0 %335
    %v337 = vrcp.pop %v318
    %v338 = vrcp.pop %v321
    %v339 = vrcp.pop %v324
    %v340 = vrcp.pop %v327
    %v341 = vrcp.pop %v330
    %v342 = vrcp.pop %v333
    %v343 = vrcp.pop %v336
    %v344 = vmul.f32 %v303, %v337
    %v345 = vmul.f32 %v305, %v338
    %v346 = vmul.f32 %v307, %v339
    %v347 = vmul.f32 %v309, %v340
    %v348 = vmul.f32 %v311, %v341
    %v349 = vmul.f32 %v313, %v342
    %v350 = vmul.f32 %v315, %v343
    %v351 = vpack.c.bf16 %v345, %v344
    %v352 = vpack.c.bf16 %v347, %v346
    %v353 = vpack.c.bf16 %v349, %v348
    %v354 = vpack.c.bf16 %v350, %v350
    %355 = vrot.lane.b32.xlu0 %v167, 64
    %v356 = vpop.permute.xlu0 %355
    %357 = vrot.lane.b32.xlu0 %v168, 64
    %v358 = vpop.permute.xlu0 %357
    %359 = vrot.lane.b32.xlu0 %v169, 64
    %v360 = vpop.permute.xlu0 %359
    %361 = vrot.lane.b32.xlu0 %v170, 64
    %v362 = vpop.permute.xlu0 %361
    %v367 = vsel %vm272, %v351, 0
    %v370 = vsel %vm272, %v352, 0
    %v373 = vsel %vm272, %v353, 0
    %v376 = vsel %vm272, %v354, 0
    %vm378 = vcmask 1040384
    %v380 = vsel %vm378, %v362, 0
    %382 = vmatprep.subr.bf16.mxu0 0
    %383 = vmatpush1.bf16.msra.mxu0 %v356
    %384 = vmatprep.subr.bf16.mxu0 0
    %385 = vmatpush1.bf16.msra.mxu0 %v358
    %386 = vmatprep.subr.bf16.mxu0 0
    %387 = vmatpush1.bf16.msra.mxu0 %v360
    %388 = vmatprep.subr.bf16.mxu0 0
    %389 = vmatpush1.bf16.msra.mxu0 %v380
    %390 = vmatprep.subr.bf16.mxu0 0
    %391 = vmatpush1.bf16.msra.mxu0 0
    %392 = vmatprep.subr.bf16.mxu0 0
    %393 = vmatpush1.bf16.msra.mxu0 0
    %394 = vmatprep.subr.bf16.mxu0 0
    %395 = vmatpush1.bf16.msra.mxu0 0
    %396 = vmatprep.subr.bf16.mxu0 0
    %397 = vmatpush1.bf16.msra.mxu0 0
    %398 = vmatprep.subr.bf16.mxu0 0
    %399 = vmatpush1.bf16.msra.mxu0 0
    %400 = vmatprep.subr.bf16.mxu0 0
    %401 = vmatpush1.bf16.msra.mxu0 0
    %402 = vmatprep.subr.bf16.mxu0 0
    %403 = vmatpush1.bf16.msra.mxu0 0
    %404 = vmatprep.subr.bf16.mxu0 0
    %405 = vmatpush1.bf16.msra.mxu0 0
    %406 = vmatprep.subr.bf16.mxu0 0
    %407 = vmatpush1.bf16.msra.mxu0 0
    %408 = vmatprep.subr.bf16.mxu0 0
    %409 = vmatpush1.bf16.msra.mxu0 0
    %410 = vmatprep.subr.bf16.mxu0 0
    %411 = vmatpush1.bf16.msra.mxu0 0
    %412 = vmatprep.subr.bf16.mxu0 0
    %413 = vmatpush1.bf16.msra.mxu0 0
    %414 = vmatprep.mubr.bf16.mxu0 0
    %415 = vmatmul.mubr.bf16.gmra.mrb[0].mxu0 %v367
    %v416 = vpop.f32.mrb[0].mxu0
    %v417 = vadd.f32 0.0, %v416
    %v418 = vpop.f32.mrb[0].mxu0
    %v419 = vpop.f32.mrb[0].mxu0
    %v420 = vadd.f32 0.0, %v419
    %v421 = vpop.f32.mrb[0].mxu0
    %422 = vmatprep.mubr.bf16.mxu0 0
    %423 = vmatmul.mubr.bf16.gmra.mrb[0].mxu0 %v370
    %v424 = vpop.f32.mrb[0].mxu0
    %v425 = vadd.f32 0.0, %v424
    %v426 = vpop.f32.mrb[0].mxu0
    %v427 = vpop.f32.mrb[0].mxu0
    %v428 = vadd.f32 0.0, %v427
    %v429 = vpop.f32.mrb[0].mxu0
    %430 = vmatprep.mubr.bf16.mxu0 0
    %431 = vmatmul.mubr.bf16.gmra.mrb[0].mxu0 %v373
    %v432 = vpop.f32.mrb[0].mxu0
    %v433 = vadd.f32 0.0, %v432
    %v434 = vpop.f32.mrb[0].mxu0
    %v435 = vpop.f32.mrb[0].mxu0
    %v436 = vadd.f32 0.0, %v435
    %v437 = vpop.f32.mrb[0].mxu0
    %438 = vmatprep.mubr.bf16.mxu0 0
    %439 = vmatmul.mubr.bf16.gmra.mrb[0].mxu0 %v376
    %v440 = vpop.f32.mrb[0].mxu0
    %v441 = vadd.f32 0.0, %v440
    %v442 = vpop.f32.mrb[0].mxu0
    %v443 = vpop.f32.mrb[0].mxu0
    %v444 = vpop.f32.mrb[0].mxu0
    %445 = vdwg.mxu0
    %v446 = vpack.c.bf16 %v420, %v417
    %v447 = vpack.c.bf16 %v428, %v425
    %v448 = vpack.c.bf16 %v436, %v433
    %v449 = vpack.c.bf16 %v441, %v441
    %v450 = vpack.c.bf16 %v163, %v163
    %451 = vrot.lane.b32.xlu0 %v167, 120
    %v452 = vpop.permute.xlu0 %451
    %453 = vrot.lane.b32.xlu0 %v168, 120
    %v454 = vpop.permute.xlu0 %453
    %455 = vrot.lane.b32.xlu0 %v169, 120
    %v456 = vpop.permute.xlu0 %455
    %457 = vrot.lane.b32.xlu0 %v170, 120
    %v458 = vpop.permute.xlu0 %457
    %459 = vrot.lane.b32.xlu0 %v167, 88
    %v460 = vpop.permute.xlu0 %459
    %461 = vrot.lane.b32.xlu0 %v168, 88
    %v462 = vpop.permute.xlu0 %461
    %463 = vrot.lane.b32.xlu0 %v169, 88
    %v464 = vpop.permute.xlu0 %463
    %465 = vrot.lane.b32.xlu0 %v170, 88
    %v466 = vpop.permute.xlu0 %465
    %v468 = vsel %vm183, %v452, 0
    %v471 = vsel %vm183, %v454, 0
    %v474 = vsel %vm183, %v456, 0
    %v477 = vsel %vm183, %v458, 0
    %v480 = vsel %vm183, %v460, 0
    %v483 = vsel %vm183, %v462, 0
    %v486 = vsel %vm183, %v464, 0
    %v489 = vsel %vm183, %v466, 0
    %491 = vmatprep.subr.bf16.mxu0 0
    %492 = vmatpush1.bf16.xpose.msra.mxu0 %v480
    %493 = vmatprep.subr.bf16.mxu0 0
    %494 = vmatpush1.bf16.xpose.msra.mxu0 %v483
    %495 = vmatprep.subr.bf16.mxu0 0
    %496 = vmatpush1.bf16.xpose.msra.mxu0 %v486
    %497 = vmatprep.subr.bf16.mxu0 0
    %498 = vmatpush1.bf16.xpose.msra.mxu0 %v489
    %499 = vmatprep.subr.bf16.mxu0 0
    %500 = vmatpush1.bf16.xpose.msra.mxu0 0
    %501 = vmatprep.subr.bf16.mxu0 0
    %502 = vmatpush1.bf16.xpose.msra.mxu0 0
    %503 = vmatprep.subr.bf16.mxu0 0
    %504 = vmatpush1.bf16.xpose.msra.mxu0 0
    %505 = vmatprep.subr.bf16.mxu0 0
    %506 = vmatpush1.bf16.xpose.msra.mxu0 0
    %507 = vmatprep.subr.bf16.mxu0 0
    %508 = vmatpush1.bf16.xpose.msra.mxu0 0
    %509 = vmatprep.subr.bf16.mxu0 0
    %510 = vmatpush1.bf16.xpose.msra.mxu0 0
    %511 = vmatprep.subr.bf16.mxu0 0
    %512 = vmatpush1.bf16.xpose.msra.mxu0 0
    %513 = vmatprep.subr.bf16.mxu0 0
    %514 = vmatpush1.bf16.xpose.msra.mxu0 0
    %515 = vmatprep.subr.bf16.mxu0 0
    %516 = vmatpush1.bf16.xpose.msra.mxu0 0
    %517 = vmatprep.subr.bf16.mxu0 0
    %518 = vmatpush1.bf16.xpose.msra.mxu0 0
    %519 = vmatprep.subr.bf16.mxu0 0
    %520 = vmatpush1.bf16.xpose.msra.mxu0 0
    %521 = vmatprep.subr.bf16.mxu0 0
    %522 = vmatpush1.bf16.xpose.msra.mxu0 0
    %523 = vmatprep.mubr.bf16.mxu0 0
    %524 = vmatmul.mubr.bf16.gmra.mrb[0].mxu0 %v468
    %v525 = vpop.f32.mrb[0].mxu0
    %v526 = vadd.f32 0.0, %v525
    %v527 = vpop.f32.mrb[0].mxu0
    %v528 = vpop.f32.mrb[0].mxu0
    %v529 = vadd.f32 0.0, %v528
    %v530 = vpop.f32.mrb[0].mxu0
    %531 = vmatprep.mubr.bf16.mxu0 0
    %532 = vmatmul.mubr.bf16.gmra.mrb[0].mxu0 %v471
    %v533 = vpop.f32.mrb[0].mxu0
    %v534 = vadd.f32 0.0, %v533
    %v535 = vpop.f32.mrb[0].mxu0
    %v536 = vpop.f32.mrb[0].mxu0
    %v537 = vadd.f32 0.0, %v536
    %v538 = vpop.f32.mrb[0].mxu0
    %539 = vmatprep.mubr.bf16.mxu0 0
    %540 = vmatmul.mubr.bf16.gmra.mrb[0].mxu0 %v474
    %v541 = vpop.f32.mrb[0].mxu0
    %v542 = vadd.f32 0.0, %v541
    %v543 = vpop.f32.mrb[0].mxu0
    %v544 = vpop.f32.mrb[0].mxu0
    %v545 = vadd.f32 0.0, %v544
    %v546 = vpop.f32.mrb[0].mxu0
    %547 = vmatprep.mubr.bf16.mxu0 0
    %548 = vmatmul.mubr.bf16.gmra.mrb[0].mxu0 %v477
    %v549 = vpop.f32.mrb[0].mxu0
    %v550 = vadd.f32 0.0, %v549
    %v551 = vpop.f32.mrb[0].mxu0
    %v552 = vpop.f32.mrb[0].mxu0
    %v553 = vpop.f32.mrb[0].mxu0
    %554 = vdwg.mxu0
    %v555 = vsel %vm272, %v526, -inf
    %556 = vmax.xlane.f32.xlu0 %v555
    %v557 = vpop.xlane.xlu0 %556
    %v558 = vsel %vm272, %v529, -inf
    %559 = vmax.xlane.f32.xlu0 %v558
    %v560 = vpop.xlane.xlu0 %559
    %v561 = vsel %vm272, %v534, -inf
    %562 = vmax.xlane.f32.xlu0 %v561
    %v563 = vpop.xlane.xlu0 %562
    %v564 = vsel %vm272, %v537, -inf
    %565 = vmax.xlane.f32.xlu0 %v564
    %v566 = vpop.xlane.xlu0 %565
    %v567 = vsel %vm272, %v542, -inf
    %568 = vmax.xlane.f32.xlu0 %v567
    %v569 = vpop.xlane.xlu0 %568
    %v570 = vsel %vm272, %v545, -inf
    %571 = vmax.xlane.f32.xlu0 %v570
    %v572 = vpop.xlane.xlu0 %571
    %v573 = vsel %vm291, %v550, -inf
    %574 = vmax.xlane.f32.xlu0 %v573
    %v575 = vpop.xlane.xlu0 %574
    %v576 = vsub.f32 %v526, %v557
    %v577 = vsub.f32 %v529, %v560
    %v578 = vsub.f32 %v534, %v563
    %v579 = vsub.f32 %v537, %v566
    %v580 = vsub.f32 %v542, %v569
    %v581 = vsub.f32 %v545, %v572
    %v582 = vsub.f32 %v550, %v575
    %v583 = vmul.f32 %v576, 1.442695
    %v584 = vpow.pop %v583
    %v585 = vmul.f32 %v577, 1.442695
    %v586 = vpow.pop %v585
    %v587 = vmul.f32 %v578, 1.442695
    %v588 = vpow.pop %v587
    %v589 = vmul.f32 %v579, 1.442695
    %v590 = vpow.pop %v589
    %v591 = vmul.f32 %v580, 1.442695
    %v592 = vpow.pop %v591
    %v593 = vmul.f32 %v581, 1.442695
    %v594 = vpow.pop %v593
    %v595 = vmul.f32 %v582, 1.442695
    %v596 = vpow.pop %v595
    %v597 = vsel %vm272, %v584, 0.0
    %598 = vadd.xlane.f32.xlu0 %v597
    %v599 = vpop.xlane.xlu0 %598
    %v600 = vsel %vm272, %v586, 0.0
    %601 = vadd.xlane.f32.xlu0 %v600
    %v602 = vpop.xlane.xlu0 %601
    %v603 = vsel %vm272, %v588, 0.0
    %604 = vadd.xlane.f32.xlu0 %v603
    %v605 = vpop.xlane.xlu0 %604
    %v606 = vsel %vm272, %v590, 0.0
    %607 = vadd.xlane.f32.xlu0 %v606
    %v608 = vpop.xlane.xlu0 %607
    %v609 = vsel %vm272, %v592, 0.0
    %610 = vadd.xlane.f32.xlu0 %v609
    %v611 = vpop.xlane.xlu0 %610
    %v612 = vsel %vm272, %v594, 0.0
    %613 = vadd.xlane.f32.xlu0 %v612
    %v614 = vpop.xlane.xlu0 %613
    %v615 = vsel %vm291, %v596, 0.0
    %616 = vadd.xlane.f32.xlu0 %v615
    %v617 = vpop.xlane.xlu0 %616
    %v618 = vrcp.pop %v599
    %v619 = vrcp.pop %v602
    %v620 = vrcp.pop %v605
    %v621 = vrcp.pop %v608
    %v622 = vrcp.pop %v611
    %v623 = vrcp.pop %v614
    %v624 = vrcp.pop %v617
    %v625 = vmul.f32 %v584, %v618
    %v626 = vmul.f32 %v586, %v619
    %v627 = vmul.f32 %v588, %v620
    %v628 = vmul.f32 %v590, %v621
    %v629 = vmul.f32 %v592, %v622
    %v630 = vmul.f32 %v594, %v623
    %v631 = vmul.f32 %v596, %v624
    %v632 = vpack.c.bf16 %v626, %v625
    %v633 = vpack.c.bf16 %v628, %v627
    %v634 = vpack.c.bf16 %v630, %v629
    %v635 = vpack.c.bf16 %v631, %v631
    %636 = vrot.lane.b32.xlu0 %v167, 56
    %v637 = vpop.permute.xlu0 %636
    %638 = vrot.lane.b32.xlu0 %v168, 56
    %v639 = vpop.permute.xlu0 %638
    %640 = vrot.lane.b32.xlu0 %v169, 56
    %v641 = vpop.permute.xlu0 %640
    %642 = vrot.lane.b32.xlu0 %v170, 56
    %v643 = vpop.permute.xlu0 %642
    %v648 = vsel %vm272, %v632, 0
    %v651 = vsel %vm272, %v633, 0
    %v654 = vsel %vm272, %v634, 0
    %v657 = vsel %vm272, %v635, 0
    %v660 = vsel %vm378, %v643, 0
    %662 = vmatprep.subr.bf16.mxu0 0
    %663 = vmatpush1.bf16.msra.mxu0 %v637
    %664 = vmatprep.subr.bf16.mxu0 0
    %665 = vmatpush1.bf16.msra.mxu0 %v639
    %666 = vmatprep.subr.bf16.mxu0 0
    %667 = vmatpush1.bf16.msra.mxu0 %v641
    %668 = vmatprep.subr.bf16.mxu0 0
    %669 = vmatpush1.bf16.msra.mxu0 %v660
    %670 = vmatprep.subr.bf16.mxu0 0
    %671 = vmatpush1.bf16.msra.mxu0 0
    %672 = vmatprep.subr.bf16.mxu0 0
    %673 = vmatpush1.bf16.msra.mxu0 0
    %674 = vmatprep.subr.bf16.mxu0 0
    %675 = vmatpush1.bf16.msra.mxu0 0
    %676 = vmatprep.subr.bf16.mxu0 0
    %677 = vmatpush1.bf16.msra.mxu0 0
    %678 = vmatprep.subr.bf16.mxu0 0
    %679 = vmatpush1.bf16.msra.mxu0 0
    %680 = vmatprep.subr.bf16.mxu0 0
    %681 = vmatpush1.bf16.msra.mxu0 0
    %682 = vmatprep.subr.bf16.mxu0 0
    %683 = vmatpush1.bf16.msra.mxu0 0
    %684 = vmatprep.subr.bf16.mxu0 0
    %685 = vmatpush1.bf16.msra.mxu0 0
    %686 = vmatprep.subr.bf16.mxu0 0
    %687 = vmatpush1.bf16.msra.mxu0 0
    %688 = vmatprep.subr.bf16.mxu0 0
    %689 = vmatpush1.bf16.msra.mxu0 0
    %690 = vmatprep.subr.bf16.mxu0 0
    %691 = vmatpush1.bf16.msra.mxu0 0
    %692 = vmatprep.subr.bf16.mxu0 0
    %693 = vmatpush1.bf16.msra.mxu0 0
    %694 = vmatprep.mubr.bf16.mxu0 0
    %695 = vmatmul.mubr.bf16.gmra.mrb[0].mxu0 %v648
    %v696 = vpop.f32.mrb[0].mxu0
    %v697 = vadd.f32 0.0, %v696
    %v698 = vpop.f32.mrb[0].mxu0
    %v699 = vpop.f32.mrb[0].mxu0
    %v700 = vadd.f32 0.0, %v699
    %v701 = vpop.f32.mrb[0].mxu0
    %702 = vmatprep.mubr.bf16.mxu0 0
    %703 = vmatmul.mubr.bf16.gmra.mrb[0].mxu0 %v651
    %v704 = vpop.f32.mrb[0].mxu0
    %v705 = vadd.f32 0.0, %v704
    %v706 = vpop.f32.mrb[0].mxu0
    %v707 = vpop.f32.mrb[0].mxu0
    %v708 = vadd.f32 0.0, %v707
    %v709 = vpop.f32.mrb[0].mxu0
    %710 = vmatprep.mubr.bf16.mxu0 0
    %711 = vmatmul.mubr.bf16.gmra.mrb[0].mxu0 %v654
    %v712 = vpop.f32.mrb[0].mxu0
    %v713 = vadd.f32 0.0, %v712
    %v714 = vpop.f32.mrb[0].mxu0
    %v715 = vpop.f32.mrb[0].mxu0
    %v716 = vadd.f32 0.0, %v715
    %v717 = vpop.f32.mrb[0].mxu0
    %718 = vmatprep.mubr.bf16.mxu0 0
    %719 = vmatmul.mubr.bf16.gmra.mrb[0].mxu0 %v657
    %v720 = vpop.f32.mrb[0].mxu0
    %v721 = vadd.f32 0.0, %v720
    %v722 = vpop.f32.mrb[0].mxu0
    %v723 = vpop.f32.mrb[0].mxu0
    %v724 = vpop.f32.mrb[0].mxu0
    %725 = vdwg.mxu0
    %v726 = vpack.c.bf16 %v700, %v697
    %v727 = vpack.c.bf16 %v708, %v705
    %v728 = vpack.c.bf16 %v716, %v713
    %v729 = vpack.c.bf16 %v721, %v721
    %v730 = vpack.c.bf16 %v164, %v164
    %v732 = vsel %vm183, %v726, 0
    %v735 = vsel %vm183, %v727, 0
    %v738 = vsel %vm183, %v728, 0
    %v741 = vsel %vm183, %v729, 0
    %vm743 = vcmask 1043456
    %v745 = vsel %vm743, %v730, 0
    %747 = vmatprep.subr.bf16.mxu0 0
    %748 = vmatpush1.bf16.msra.mxu0 %v745
    %749 = vmatprep.subr.bf16.mxu0 0
    %750 = vmatpush1.bf16.msra.mxu0 0
    %751 = vmatprep.subr.bf16.mxu0 0
    %752 = vmatpush1.bf16.msra.mxu0 0
    %753 = vmatprep.subr.bf16.mxu0 0
    %754 = vmatpush1.bf16.msra.mxu0 0
    %755 = vmatprep.subr.bf16.mxu0 0
    %756 = vmatpush1.bf16.msra.mxu0 0
    %757 = vmatprep.subr.bf16.mxu0 0
    %758 = vmatpush1.bf16.msra.mxu0 0
    %759 = vmatprep.subr.bf16.mxu0 0
    %760 = vmatpush1.bf16.msra.mxu0 0
    %761 = vmatprep.subr.bf16.mxu0 0
    %762 = vmatpush1.bf16.msra.mxu0 0
    %763 = vmatprep.subr.bf16.mxu0 0
    %764 = vmatpush1.bf16.msra.mxu0 0
    %765 = vmatprep.subr.bf16.mxu0 0
    %766 = vmatpush1.bf16.msra.mxu0 0
    %767 = vmatprep.subr.bf16.mxu0 0
    %768 = vmatpush1.bf16.msra.mxu0 0
    %769 = vmatprep.subr.bf16.mxu0 0
    %770 = vmatpush1.bf16.msra.mxu0 0
    %771 = vmatprep.subr.bf16.mxu0 0
    %772 = vmatpush1.bf16.msra.mxu0 0
    %773 = vmatprep.subr.bf16.mxu0 0
    %774 = vmatpush1.bf16.msra.mxu0 0
    %775 = vmatprep.subr.bf16.mxu0 0
    %776 = vmatpush1.bf16.msra.mxu0 0
    %777 = vmatprep.subr.bf16.mxu0 0
    %778 = vmatpush1.bf16.msra.mxu0 0
    %779 = vmatprep.mubr.bf16.mxu0 0
    %780 = vmatmul.mubr.bf16.gmra.mrb[0].mxu0 %v732
    %v781 = vpop.f32.mrb[0].mxu0
    %v782 = vadd.f32 0.0, %v781
    %v783 = vpop.f32.mrb[0].mxu0
    %v784 = vpop.f32.mrb[0].mxu0
    %v785 = vadd.f32 0.0, %v784
    %v786 = vpop.f32.mrb[0].mxu0
    %787 = vmatprep.mubr.bf16.mxu0 0
    %788 = vmatmul.mubr.bf16.gmra.mrb[0].mxu0 %v735
    %v789 = vpop.f32.mrb[0].mxu0
    %v790 = vadd.f32 0.0, %v789
    %v791 = vpop.f32.mrb[0].mxu0
    %v792 = vpop.f32.mrb[0].mxu0
    %v793 = vadd.f32 0.0, %v792
    %v794 = vpop.f32.mrb[0].mxu0
    %795 = vmatprep.mubr.bf16.mxu0 0
    %796 = vmatmul.mubr.bf16.gmra.mrb[0].mxu0 %v738
    %v797 = vpop.f32.mrb[0].mxu0
    %v798 = vadd.f32 0.0, %v797
    %v799 = vpop.f32.mrb[0].mxu0
    %v800 = vpop.f32.mrb[0].mxu0
    %v801 = vadd.f32 0.0, %v800
    %v802 = vpop.f32.mrb[0].mxu0
    %803 = vmatprep.mubr.bf16.mxu0 0
    %804 = vmatmul.mubr.bf16.gmra.mrb[0].mxu0 %v741
    %v805 = vpop.f32.mrb[0].mxu0
    %v806 = vadd.f32 0.0, %v805
    %v807 = vpop.f32.mrb[0].mxu0
    %v808 = vpop.f32.mrb[0].mxu0
    %v809 = vpop.f32.mrb[0].mxu0
    %810 = vdwg.mxu0
    %v812 = vsel %vm183, %v446, 0
    %v815 = vsel %vm183, %v447, 0
    %v818 = vsel %vm183, %v448, 0
    %v821 = vsel %vm183, %v449, 0
    %v824 = vsel %vm743, %v450, 0
    %826 = vmatprep.subr.bf16.mxu0 0
    %827 = vmatpush1.bf16.msra.mxu0 %v824
    %828 = vmatprep.subr.bf16.mxu0 0
    %829 = vmatpush1.bf16.msra.mxu0 0
    %830 = vmatprep.subr.bf16.mxu0 0
    %831 = vmatpush1.bf16.msra.mxu0 0
    %832 = vmatprep.subr.bf16.mxu0 0
    %833 = vmatpush1.bf16.msra.mxu0 0
    %834 = vmatprep.subr.bf16.mxu0 0
    %835 = vmatpush1.bf16.msra.mxu0 0
    %836 = vmatprep.subr.bf16.mxu0 0
    %837 = vmatpush1.bf16.msra.mxu0 0
    %838 = vmatprep.subr.bf16.mxu0 0
    %839 = vmatpush1.bf16.msra.mxu0 0
    %840 = vmatprep.subr.bf16.mxu0 0
    %841 = vmatpush1.bf16.msra.mxu0 0
    %842 = vmatprep.subr.bf16.mxu0 0
    %843 = vmatpush1.bf16.msra.mxu0 0
    %844 = vmatprep.subr.bf16.mxu0 0
    %845 = vmatpush1.bf16.msra.mxu0 0
    %846 = vmatprep.subr.bf16.mxu0 0
    %847 = vmatpush1.bf16.msra.mxu0 0
    %848 = vmatprep.subr.bf16.mxu0 0
    %849 = vmatpush1.bf16.msra.mxu0 0
    %850 = vmatprep.subr.bf16.mxu0 0
    %851 = vmatpush1.bf16.msra.mxu0 0
    %852 = vmatprep.subr.bf16.mxu0 0
    %853 = vmatpush1.bf16.msra.mxu0 0
    %854 = vmatprep.subr.bf16.mxu0 0
    %855 = vmatpush1.bf16.msra.mxu0 0
    %856 = vmatprep.subr.bf16.mxu0 0
    %857 = vmatpush1.bf16.msra.mxu0 0
    %858 = vmatprep.mubr.bf16.mxu0 0
    %859 = vmatmul.mubr.bf16.gmra.mrb[0].mxu0 %v812
    %v860 = vpop.f32.mrb[0].mxu0
    %v861 = vadd.f32 %v782, %v860
    %v862 = vpop.f32.mrb[0].mxu0
    %v863 = vpop.f32.mrb[0].mxu0
    %v864 = vadd.f32 %v785, %v863
    %v865 = vpop.f32.mrb[0].mxu0
    %866 = vmatprep.mubr.bf16.mxu0 0
    %867 = vmatmul.mubr.bf16.gmra.mrb[0].mxu0 %v815
    %v868 = vpop.f32.mrb[0].mxu0
    %v869 = vadd.f32 %v790, %v868
    %v870 = vpop.f32.mrb[0].mxu0
    %v871 = vpop.f32.mrb[0].mxu0
    %v872 = vadd.f32 %v793, %v871
    %v873 = vpop.f32.mrb[0].mxu0
    %874 = vmatprep.mubr.bf16.mxu0 0
    %875 = vmatmul.mubr.bf16.gmra.mrb[0].mxu0 %v818
    %v876 = vpop.f32.mrb[0].mxu0
    %v877 = vadd.f32 %v798, %v876
    %v878 = vpop.f32.mrb[0].mxu0
    %v879 = vpop.f32.mrb[0].mxu0
    %v880 = vadd.f32 %v801, %v879
    %v881 = vpop.f32.mrb[0].mxu0
    %882 = vmatprep.mubr.bf16.mxu0 0
    %883 = vmatmul.mubr.bf16.gmra.mrb[0].mxu0 %v821
    %v884 = vpop.f32.mrb[0].mxu0
    %v885 = vadd.f32 %v806, %v884
    %v886 = vpop.f32.mrb[0].mxu0
    %v887 = vpop.f32.mrb[0].mxu0
    %v888 = vpop.f32.mrb[0].mxu0
    %889 = vdwg.mxu0
    %890 = vrot.lane.b32.xlu0 %v167, 112
    %v891 = vpop.permute.xlu0 %890
    %892 = vrot.lane.b32.xlu0 %v168, 112
    %v893 = vpop.permute.xlu0 %892
    %894 = vrot.lane.b32.xlu0 %v169, 112
    %v895 = vpop.permute.xlu0 %894
    %896 = vrot.lane.b32.xlu0 %v170, 112
    %v897 = vpop.permute.xlu0 %896
    %898 = vrot.lane.b32.xlu0 %v167, 80
    %v899 = vpop.permute.xlu0 %898
    %900 = vrot.lane.b32.xlu0 %v168, 80
    %v901 = vpop.permute.xlu0 %900
    %902 = vrot.lane.b32.xlu0 %v169, 80
    %v903 = vpop.permute.xlu0 %902
    %904 = vrot.lane.b32.xlu0 %v170, 80
    %v905 = vpop.permute.xlu0 %904
    %v907 = vsel %vm183, %v891, 0
    %v910 = vsel %vm183, %v893, 0
    %v913 = vsel %vm183, %v895, 0
    %v916 = vsel %vm183, %v897, 0
    %v919 = vsel %vm183, %v899, 0
    %v922 = vsel %vm183, %v901, 0
    %v925 = vsel %vm183, %v903, 0
    %v928 = vsel %vm183, %v905, 0
    %930 = vmatprep.subr.bf16.mxu0 0
    %931 = vmatpush1.bf16.xpose.msra.mxu0 %v919
    %932 = vmatprep.subr.bf16.mxu0 0
    %933 = vmatpush1.bf16.xpose.msra.mxu0 %v922
    %934 = vmatprep.subr.bf16.mxu0 0
    %935 = vmatpush1.bf16.xpose.msra.mxu0 %v925
    %936 = vmatprep.subr.bf16.mxu0 0
    %937 = vmatpush1.bf16.xpose.msra.mxu0 %v928
    %938 = vmatprep.subr.bf16.mxu0 0
    %939 = vmatpush1.bf16.xpose.msra.mxu0 0
    %940 = vmatprep.subr.bf16.mxu0 0
    %941 = vmatpush1.bf16.xpose.msra.mxu0 0
    %942 = vmatprep.subr.bf16.mxu0 0
    %943 = vmatpush1.bf16.xpose.msra.mxu0 0
    %944 = vmatprep.subr.bf16.mxu0 0
    %945 = vmatpush1.bf16.xpose.msra.mxu0 0
    %946 = vmatprep.subr.bf16.mxu0 0
    %947 = vmatpush1.bf16.xpose.msra.mxu0 0
    %948 = vmatprep.subr.bf16.mxu0 0
    %949 = vmatpush1.bf16.xpose.msra.mxu0 0
    %950 = vmatprep.subr.bf16.mxu0 0
    %951 = vmatpush1.bf16.xpose.msra.mxu0 0
    %952 = vmatprep.subr.bf16.mxu0 0
    %953 = vmatpush1.bf16.xpose.msra.mxu0 0
    %954 = vmatprep.subr.bf16.mxu0 0
    %955 = vmatpush1.bf16.xpose.msra.mxu0 0
    %956 = vmatprep.subr.bf16.mxu0 0
    %957 = vmatpush1.bf16.xpose.msra.mxu0 0
    %958 = vmatprep.subr.bf16.mxu0 0
    %959 = vmatpush1.bf16.xpose.msra.mxu0 0
    %960 = vmatprep.subr.bf16.mxu0 0
    %961 = vmatpush1.bf16.xpose.msra.mxu0 0
    %962 = vmatprep.mubr.bf16.mxu0 0
    %963 = vmatmul.mubr.bf16.gmra.mrb[0].mxu0 %v907
    %v964 = vpop.f32.mrb[0].mxu0
    %v965 = vadd.f32 0.0, %v964
    %v966 = vpop.f32.mrb[0].mxu0
    %v967 = vpop.f32.mrb[0].mxu0
    %v968 = vadd.f32 0.0, %v967
    %v969 = vpop.f32.mrb[0].mxu0
    %970 = vmatprep.mubr.bf16.mxu0 0
    %971 = vmatmul.mubr.bf16.gmra.mrb[0].mxu0 %v910
    %v972 = vpop.f32.mrb[0].mxu0
    %v973 = vadd.f32 0.0, %v972
    %v974 = vpop.f32.mrb[0].mxu0
    %v975 = vpop.f32.mrb[0].mxu0
    %v976 = vadd.f32 0.0, %v975
    %v977 = vpop.f32.mrb[0].mxu0
    %978 = vmatprep.mubr.bf16.mxu0 0
    %979 = vmatmul.mubr.bf16.gmra.mrb[0].mxu0 %v913
    %v980 = vpop.f32.mrb[0].mxu0
    %v981 = vadd.f32 0.0, %v980
    %v982 = vpop.f32.mrb[0].mxu0
    %v983 = vpop.f32.mrb[0].mxu0
    %v984 = vadd.f32 0.0, %v983
    %v985 = vpop.f32.mrb[0].mxu0
    %986 = vmatprep.mubr.bf16.mxu0 0
    %987 = vmatmul.mubr.bf16.gmra.mrb[0].mxu0 %v916
    %v988 = vpop.f32.mrb[0].mxu0
    %v989 = vadd.f32 0.0, %v988
    %v990 = vpop.f32.mrb[0].mxu0
    %v991 = vpop.f32.mrb[0].mxu0
    %v992 = vpop.f32.mrb[0].mxu0
    %993 = vdwg.mxu0
    %v994 = vsel %vm272, %v965, -inf
    %995 = vmax.xlane.f32.xlu0 %v994
    %v996 = vpop.xlane.xlu0 %995
    %v997 = vsel %vm272, %v968, -inf
    %998 = vmax.xlane.f32.xlu0 %v997
    %v999 = vpop.xlane.xlu0 %998
    %v1000 = vsel %vm272, %v973, -inf
    %1001 = vmax.xlane.f32.xlu0 %v1000
    %v1002 = vpop.xlane.xlu0 %1001
    %v1003 = vsel %vm272, %v976, -inf
    %1004 = vmax.xlane.f32.xlu0 %v1003
    %v1005 = vpop.xlane.xlu0 %1004
    %v1006 = vsel %vm272, %v981, -inf
    %1007 = vmax.xlane.f32.xlu0 %v1006
    %v1008 = vpop.xlane.xlu0 %1007
    %v1009 = vsel %vm272, %v984, -inf
    %1010 = vmax.xlane.f32.xlu0 %v1009
    %v1011 = vpop.xlane.xlu0 %1010
    %v1012 = vsel %vm291, %v989, -inf
    %1013 = vmax.xlane.f32.xlu0 %v1012
    %v1014 = vpop.xlane.xlu0 %1013
    %v1015 = vsub.f32 %v965, %v996
    %v1016 = vsub.f32 %v968, %v999
    %v1017 = vsub.f32 %v973, %v1002
    %v1018 = vsub.f32 %v976, %v1005
    %v1019 = vsub.f32 %v981, %v1008
    %v1020 = vsub.f32 %v984, %v1011
    %v1021 = vsub.f32 %v989, %v1014
    %v1022 = vmul.f32 %v1015, 1.442695
    %v1023 = vpow.pop %v1022
    %v1024 = vmul.f32 %v1016, 1.442695
    %v1025 = vpow.pop %v1024
    %v1026 = vmul.f32 %v1017, 1.442695
    %v1027 = vpow.pop %v1026
    %v1028 = vmul.f32 %v1018, 1.442695
    %v1029 = vpow.pop %v1028
    %v1030 = vmul.f32 %v1019, 1.442695
    %v1031 = vpow.pop %v1030
    %v1032 = vmul.f32 %v1020, 1.442695
    %v1033 = vpow.pop %v1032
    %v1034 = vmul.f32 %v1021, 1.442695
    %v1035 = vpow.pop %v1034
    %v1036 = vsel %vm272, %v1023, 0.0
    %1037 = vadd.xlane.f32.xlu0 %v1036
    %v1038 = vpop.xlane.xlu0 %1037
    %v1039 = vsel %vm272, %v1025, 0.0
    %1040 = vadd.xlane.f32.xlu0 %v1039
    %v1041 = vpop.xlane.xlu0 %1040
    %v1042 = vsel %vm272, %v1027, 0.0
    %1043 = vadd.xlane.f32.xlu0 %v1042
    %v1044 = vpop.xlane.xlu0 %1043
    %v1045 = vsel %vm272, %v1029, 0.0
    %1046 = vadd.xlane.f32.xlu0 %v1045
    %v1047 = vpop.xlane.xlu0 %1046
    %v1048 = vsel %vm272, %v1031, 0.0
    %1049 = vadd.xlane.f32.xlu0 %v1048
    %v1050 = vpop.xlane.xlu0 %1049
    %v1051 = vsel %vm272, %v1033, 0.0
    %1052 = vadd.xlane.f32.xlu0 %v1051
    %v1053 = vpop.xlane.xlu0 %1052
    %v1054 = vsel %vm291, %v1035, 0.0
    %1055 = vadd.xlane.f32.xlu0 %v1054
    %v1056 = vpop.xlane.xlu0 %1055
    %v1057 = vrcp.pop %v1038
    %v1058 = vrcp.pop %v1041
    %v1059 = vrcp.pop %v1044
    %v1060 = vrcp.pop %v1047
    %v1061 = vrcp.pop %v1050
    %v1062 = vrcp.pop %v1053
    %v1063 = vrcp.pop %v1056
    %v1064 = vmul.f32 %v1023, %v1057
    %v1065 = vmul.f32 %v1025, %v1058
    %v1066 = vmul.f32 %v1027, %v1059
    %v1067 = vmul.f32 %v1029, %v1060
    %v1068 = vmul.f32 %v1031, %v1061
    %v1069 = vmul.f32 %v1033, %v1062
    %v1070 = vmul.f32 %v1035, %v1063
    %v1071 = vpack.c.bf16 %v1065, %v1064
    %v1072 = vpack.c.bf16 %v1067, %v1066
    %v1073 = vpack.c.bf16 %v1069, %v1068
    %v1074 = vpack.c.bf16 %v1070, %v1070
    %1075 = vrot.lane.b32.xlu0 %v167, 48
    %v1076 = vpop.permute.xlu0 %1075
    %1077 = vrot.lane.b32.xlu0 %v168, 48
    %v1078 = vpop.permute.xlu0 %1077
    %1079 = vrot.lane.b32.xlu0 %v169, 48
    %v1080 = vpop.permute.xlu0 %1079
    %1081 = vrot.lane.b32.xlu0 %v170, 48
    %v1082 = vpop.permute.xlu0 %1081
    %v1087 = vsel %vm272, %v1071, 0
    %v1090 = vsel %vm272, %v1072, 0
    %v1093 = vsel %vm272, %v1073, 0
    %v1096 = vsel %vm272, %v1074, 0
    %v1099 = vsel %vm378, %v1082, 0
    %1101 = vmatprep.subr.bf16.mxu0 0
    %1102 = vmatpush1.bf16.msra.mxu0 %v1076
    %1103 = vmatprep.subr.bf16.mxu0 0
    %1104 = vmatpush1.bf16.msra.mxu0 %v1078
    %1105 = vmatprep.subr.bf16.mxu0 0
    %1106 = vmatpush1.bf16.msra.mxu0 %v1080
    %1107 = vmatprep.subr.bf16.mxu0 0
    %1108 = vmatpush1.bf16.msra.mxu0 %v1099
    %1109 = vmatprep.subr.bf16.mxu0 0
    %1110 = vmatpush1.bf16.msra.mxu0 0
    %1111 = vmatprep.subr.bf16.mxu0 0
    %1112 = vmatpush1.bf16.msra.mxu0 0
    %1113 = vmatprep.subr.bf16.mxu0 0
    %1114 = vmatpush1.bf16.msra.mxu0 0
    %1115 = vmatprep.subr.bf16.mxu0 0
    %1116 = vmatpush1.bf16.msra.mxu0 0
    %1117 = vmatprep.subr.bf16.mxu0 0
    %1118 = vmatpush1.bf16.msra.mxu0 0
    %1119 = vmatprep.subr.bf16.mxu0 0
    %1120 = vmatpush1.bf16.msra.mxu0 0
    %1121 = vmatprep.subr.bf16.mxu0 0
    %1122 = vmatpush1.bf16.msra.mxu0 0
    %1123 = vmatprep.subr.bf16.mxu0 0
    %1124 = vmatpush1.bf16.msra.mxu0 0
    %1125 = vmatprep.subr.bf16.mxu0 0
    %1126 = vmatpush1.bf16.msra.mxu0 0
    %1127 = vmatprep.subr.bf16.mxu0 0
    %1128 = vmatpush1.bf16.msra.mxu0 0
    %1129 = vmatprep.subr.bf16.mxu0 0
    %1130 = vmatpush1.bf16.msra.mxu0 0
    %1131 = vmatprep.subr.bf16.mxu0 0
    %1132 = vmatpush1.bf16.msra.mxu0 0
    %1133 = vmatprep.mubr.bf16.mxu0 0
    %1134 = vmatmul.mubr.bf16.gmra.mrb[0].mxu0 %v1087
    %v1135 = vpop.f32.mrb[0].mxu0
    %v1136 = vadd.f32 0.0, %v1135
    %v1137 = vpop.f32.mrb[0].mxu0
    %v1138 = vpop.f32.mrb[0].mxu0
    %v1139 = vadd.f32 0.0, %v1138
    %v1140 = vpop.f32.mrb[0].mxu0
    %1141 = vmatprep.mubr.bf16.mxu0 0
    %1142 = vmatmul.mubr.bf16.gmra.mrb[0].mxu0 %v1090
    %v1143 = vpop.f32.mrb[0].mxu0
    %v1144 = vadd.f32 0.0, %v1143
    %v1145 = vpop.f32.mrb[0].mxu0
    %v1146 = vpop.f32.mrb[0].mxu0
    %v1147 = vadd.f32 0.0, %v1146
    %v1148 = vpop.f32.mrb[0].mxu0
    %1149 = vmatprep.mubr.bf16.mxu0 0
    %1150 = vmatmul.mubr.bf16.gmra.mrb[0].mxu0 %v1093
    %v1151 = vpop.f32.mrb[0].mxu0
    %v1152 = vadd.f32 0.0, %v1151
    %v1153 = vpop.f32.mrb[0].mxu0
    %v1154 = vpop.f32.mrb[0].mxu0
    %v1155 = vadd.f32 0.0, %v1154
    %v1156 = vpop.f32.mrb[0].mxu0
    %1157 = vmatprep.mubr.bf16.mxu0 0
    %1158 = vmatmul.mubr.bf16.gmra.mrb[0].mxu0 %v1096
    %v1159 = vpop.f32.mrb[0].mxu0
    %v1160 = vadd.f32 0.0, %v1159
    %v1161 = vpop.f32.mrb[0].mxu0
    %v1162 = vpop.f32.mrb[0].mxu0
    %v1163 = vpop.f32.mrb[0].mxu0
    %1164 = vdwg.mxu0
    %v1165 = vpack.c.bf16 %v1139, %v1136
    %v1166 = vpack.c.bf16 %v1147, %v1144
    %v1167 = vpack.c.bf16 %v1155, %v1152
    %v1168 = vpack.c.bf16 %v1160, %v1160
    %v1169 = vpack.c.bf16 %v165, %v165
    %v1171 = vsel %vm183, %v1165, 0
    %v1174 = vsel %vm183, %v1166, 0
    %v1177 = vsel %vm183, %v1167, 0
    %v1180 = vsel %vm183, %v1168, 0
    %v1183 = vsel %vm743, %v1169, 0
    %1185 = vmatprep.subr.bf16.mxu0 0
    %1186 = vmatpush1.bf16.msra.mxu0 %v1183
    %1187 = vmatprep.subr.bf16.mxu0 0
    %1188 = vmatpush1.bf16.msra.mxu0 0
    %1189 = vmatprep.subr.bf16.mxu0 0
    %1190 = vmatpush1.bf16.msra.mxu0 0
    %1191 = vmatprep.subr.bf16.mxu0 0
    %1192 = vmatpush1.bf16.msra.mxu0 0
    %1193 = vmatprep.subr.bf16.mxu0 0
    %1194 = vmatpush1.bf16.msra.mxu0 0
    %1195 = vmatprep.subr.bf16.mxu0 0
    %1196 = vmatpush1.bf16.msra.mxu0 0
    %1197 = vmatprep.subr.bf16.mxu0 0
    %1198 = vmatpush1.bf16.msra.mxu0 0
    %1199 = vmatprep.subr.bf16.mxu0 0
    %1200 = vmatpush1.bf16.msra.mxu0 0
    %1201 = vmatprep.subr.bf16.mxu0 0
    %1202 = vmatpush1.bf16.msra.mxu0 0
    %1203 = vmatprep.subr.bf16.mxu0 0
    %1204 = vmatpush1.bf16.msra.mxu0 0
    %1205 = vmatprep.subr.bf16.mxu0 0
    %1206 = vmatpush1.bf16.msra.mxu0 0
    %1207 = vmatprep.subr.bf16.mxu0 0
    %1208 = vmatpush1.bf16.msra.mxu0 0
    %1209 = vmatprep.subr.bf16.mxu0 0
    %1210 = vmatpush1.bf16.msra.mxu0 0
    %1211 = vmatprep.subr.bf16.mxu0 0
    %1212 = vmatpush1.bf16.msra.mxu0 0
    %1213 = vmatprep.subr.bf16.mxu0 0
    %1214 = vmatpush1.bf16.msra.mxu0 0
    %1215 = vmatprep.subr.bf16.mxu0 0
    %1216 = vmatpush1.bf16.msra.mxu0 0
    %1217 = vmatprep.mubr.bf16.mxu0 0
    %1218 = vmatmul.mubr.bf16.gmra.mrb[0].mxu0 %v1171
    %v1219 = vpop.f32.mrb[0].mxu0
    %v1220 = vadd.f32 0.0, %v1219
    %v1221 = vpop.f32.mrb[0].mxu0
    %v1222 = vpop.f32.mrb[0].mxu0
    %v1223 = vadd.f32 0.0, %v1222
    %v1224 = vpop.f32.mrb[0].mxu0
    %1225 = vmatprep.mubr.bf16.mxu0 0
    %1226 = vmatmul.mubr.bf16.gmra.mrb[0].mxu0 %v1174
    %v1227 = vpop.f32.mrb[0].mxu0
    %v1228 = vadd.f32 0.0, %v1227
    %v1229 = vpop.f32.mrb[0].mxu0
    %v1230 = vpop.f32.mrb[0].mxu0
    %v1231 = vadd.f32 0.0, %v1230
    %v1232 = vpop.f32.mrb[0].mxu0
    %1233 = vmatprep.mubr.bf16.mxu0 0
    %1234 = vmatmul.mubr.bf16.gmra.mrb[0].mxu0 %v1177
    %v1235 = vpop.f32.mrb[0].mxu0
    %v1236 = vadd.f32 0.0, %v1235
    %v1237 = vpop.f32.mrb[0].mxu0
    %v1238 = vpop.f32.mrb[0].mxu0
    %v1239 = vadd.f32 0.0, %v1238
    %v1240 = vpop.f32.mrb[0].mxu0
    %1241 = vmatprep.mubr.bf16.mxu0 0
    %1242 = vmatmul.mubr.bf16.gmra.mrb[0].mxu0 %v1180
    %v1243 = vpop.f32.mrb[0].mxu0
    %v1244 = vadd.f32 0.0, %v1243
    %v1245 = vpop.f32.mrb[0].mxu0
    %v1246 = vpop.f32.mrb[0].mxu0
    %v1247 = vpop.f32.mrb[0].mxu0
    %1248 = vdwg.mxu0
    %v1249 = vadd.f32 %v861, %v1220
    %v1250 = vadd.f32 %v864, %v1223
    %v1251 = vadd.f32 %v869, %v1228
    %v1252 = vadd.f32 %v872, %v1231
    %v1253 = vadd.f32 %v877, %v1236
    %v1254 = vadd.f32 %v880, %v1239
    %v1255 = vadd.f32 %v885, %v1244
    %1256 = vrot.lane.b32.xlu0 %v167, 104
    %v1257 = vpop.permute.xlu0 %1256
    %1258 = vrot.lane.b32.xlu0 %v168, 104
    %v1259 = vpop.permute.xlu0 %1258
    %1260 = vrot.lane.b32.xlu0 %v169, 104
    %v1261 = vpop.permute.xlu0 %1260
    %1262 = vrot.lane.b32.xlu0 %v170, 104
    %v1263 = vpop.permute.xlu0 %1262
    %1264 = vrot.lane.b32.xlu0 %v167, 72
    %v1265 = vpop.permute.xlu0 %1264
    %1266 = vrot.lane.b32.xlu0 %v168, 72
    %v1267 = vpop.permute.xlu0 %1266
    %1268 = vrot.lane.b32.xlu0 %v169, 72
    %v1269 = vpop.permute.xlu0 %1268
    %1270 = vrot.lane.b32.xlu0 %v170, 72
    %v1271 = vpop.permute.xlu0 %1270
    %v1273 = vsel %vm183, %v1257, 0
    %v1276 = vsel %vm183, %v1259, 0
    %v1279 = vsel %vm183, %v1261, 0
    %v1282 = vsel %vm183, %v1263, 0
    %v1285 = vsel %vm183, %v1265, 0
    %v1288 = vsel %vm183, %v1267, 0
    %v1291 = vsel %vm183, %v1269, 0
    %v1294 = vsel %vm183, %v1271, 0
    %1296 = vmatprep.subr.bf16.mxu0 0
    %1297 = vmatpush1.bf16.xpose.msra.mxu0 %v1285
    %1298 = vmatprep.subr.bf16.mxu0 0
    %1299 = vmatpush1.bf16.xpose.msra.mxu0 %v1288
    %1300 = vmatprep.subr.bf16.mxu0 0
    %1301 = vmatpush1.bf16.xpose.msra.mxu0 %v1291
    %1302 = vmatprep.subr.bf16.mxu0 0
    %1303 = vmatpush1.bf16.xpose.msra.mxu0 %v1294
    %1304 = vmatprep.subr.bf16.mxu0 0
    %1305 = vmatpush1.bf16.xpose.msra.mxu0 0
    %1306 = vmatprep.subr.bf16.mxu0 0
    %1307 = vmatpush1.bf16.xpose.msra.mxu0 0
    %1308 = vmatprep.subr.bf16.mxu0 0
    %1309 = vmatpush1.bf16.xpose.msra.mxu0 0
    %1310 = vmatprep.subr.bf16.mxu0 0
    %1311 = vmatpush1.bf16.xpose.msra.mxu0 0
    %1312 = vmatprep.subr.bf16.mxu0 0
    %1313 = vmatpush1.bf16.xpose.msra.mxu0 0
    %1314 = vmatprep.subr.bf16.mxu0 0
    %1315 = vmatpush1.bf16.xpose.msra.mxu0 0
    %1316 = vmatprep.subr.bf16.mxu0 0
    %1317 = vmatpush1.bf16.xpose.msra.mxu0 0
    %1318 = vmatprep.subr.bf16.mxu0 0
    %1319 = vmatpush1.bf16.xpose.msra.mxu0 0
    %1320 = vmatprep.subr.bf16.mxu0 0
    %1321 = vmatpush1.bf16.xpose.msra.mxu0 0
    %1322 = vmatprep.subr.bf16.mxu0 0
    %1323 = vmatpush1.bf16.xpose.msra.mxu0 0
    %1324 = vmatprep.subr.bf16.mxu0 0
    %1325 = vmatpush1.bf16.xpose.msra.mxu0 0
    %1326 = vmatprep.subr.bf16.mxu0 0
    %1327 = vmatpush1.bf16.xpose.msra.mxu0 0
    %1328 = vmatprep.mubr.bf16.mxu0 0
    %1329 = vmatmul.mubr.bf16.gmra.mrb[0].mxu0 %v1273
    %v1330 = vpop.f32.mrb[0].mxu0
    %v1331 = vadd.f32 0.0, %v1330
    %v1332 = vpop.f32.mrb[0].mxu0
    %v1333 = vpop.f32.mrb[0].mxu0
    %v1334 = vadd.f32 0.0, %v1333
    %v1335 = vpop.f32.mrb[0].mxu0
    %1336 = vmatprep.mubr.bf16.mxu0 0
    %1337 = vmatmul.mubr.bf16.gmra.mrb[0].mxu0 %v1276
    %v1338 = vpop.f32.mrb[0].mxu0
    %v1339 = vadd.f32 0.0, %v1338
    %v1340 = vpop.f32.mrb[0].mxu0
    %v1341 = vpop.f32.mrb[0].mxu0
    %v1342 = vadd.f32 0.0, %v1341
    %v1343 = vpop.f32.mrb[0].mxu0
    %1344 = vmatprep.mubr.bf16.mxu0 0
    %1345 = vmatmul.mubr.bf16.gmra.mrb[0].mxu0 %v1279
    %v1346 = vpop.f32.mrb[0].mxu0
    %v1347 = vadd.f32 0.0, %v1346
    %v1348 = vpop.f32.mrb[0].mxu0
    %v1349 = vpop.f32.mrb[0].mxu0
    %v1350 = vadd.f32 0.0, %v1349
    %v1351 = vpop.f32.mrb[0].mxu0
    %1352 = vmatprep.mubr.bf16.mxu0 0
    %1353 = vmatmul.mubr.bf16.gmra.mrb[0].mxu0 %v1282
    %v1354 = vpop.f32.mrb[0].mxu0
    %v1355 = vadd.f32 0.0, %v1354
    %v1356 = vpop.f32.mrb[0].mxu0
    %v1357 = vpop.f32.mrb[0].mxu0
    %v1358 = vpop.f32.mrb[0].mxu0
    %1359 = vdwg.mxu0
    %v1360 = vsel %vm272, %v1331, -inf
    %1361 = vmax.xlane.f32.xlu0 %v1360
    %v1362 = vpop.xlane.xlu0 %1361
    %v1363 = vsel %vm272, %v1334, -inf
    %1364 = vmax.xlane.f32.xlu0 %v1363
    %v1365 = vpop.xlane.xlu0 %1364
    %v1366 = vsel %vm272, %v1339, -inf
    %1367 = vmax.xlane.f32.xlu0 %v1366
    %v1368 = vpop.xlane.xlu0 %1367
    %v1369 = vsel %vm272, %v1342, -inf
    %1370 = vmax.xlane.f32.xlu0 %v1369
    %v1371 = vpop.xlane.xlu0 %1370
    %v1372 = vsel %vm272, %v1347, -inf
    %1373 = vmax.xlane.f32.xlu0 %v1372
    %v1374 = vpop.xlane.xlu0 %1373
    %v1375 = vsel %vm272, %v1350, -inf
    %1376 = vmax.xlane.f32.xlu0 %v1375
    %v1377 = vpop.xlane.xlu0 %1376
    %v1378 = vsel %vm291, %v1355, -inf
    %1379 = vmax.xlane.f32.xlu0 %v1378
    %v1380 = vpop.xlane.xlu0 %1379
    %v1381 = vsub.f32 %v1331, %v1362
    %v1382 = vsub.f32 %v1334, %v1365
    %v1383 = vsub.f32 %v1339, %v1368
    %v1384 = vsub.f32 %v1342, %v1371
    %v1385 = vsub.f32 %v1347, %v1374
    %v1386 = vsub.f32 %v1350, %v1377
    %v1387 = vsub.f32 %v1355, %v1380
    %v1388 = vmul.f32 %v1381, 1.442695
    %v1389 = vpow.pop %v1388
    %v1390 = vmul.f32 %v1382, 1.442695
    %v1391 = vpow.pop %v1390
    %v1392 = vmul.f32 %v1383, 1.442695
    %v1393 = vpow.pop %v1392
    %v1394 = vmul.f32 %v1384, 1.442695
    %v1395 = vpow.pop %v1394
    %v1396 = vmul.f32 %v1385, 1.442695
    %v1397 = vpow.pop %v1396
    %v1398 = vmul.f32 %v1386, 1.442695
    %v1399 = vpow.pop %v1398
    %v1400 = vmul.f32 %v1387, 1.442695
    %v1401 = vpow.pop %v1400
    %v1402 = vsel %vm272, %v1389, 0.0
    %1403 = vadd.xlane.f32.xlu0 %v1402
    %v1404 = vpop.xlane.xlu0 %1403
    %v1405 = vsel %vm272, %v1391, 0.0
    %1406 = vadd.xlane.f32.xlu0 %v1405
    %v1407 = vpop.xlane.xlu0 %1406
    %v1408 = vsel %vm272, %v1393, 0.0
    %1409 = vadd.xlane.f32.xlu0 %v1408
    %v1410 = vpop.xlane.xlu0 %1409
    %v1411 = vsel %vm272, %v1395, 0.0
    %1412 = vadd.xlane.f32.xlu0 %v1411
    %v1413 = vpop.xlane.xlu0 %1412
    %v1414 = vsel %vm272, %v1397, 0.0
    %1415 = vadd.xlane.f32.xlu0 %v1414
    %v1416 = vpop.xlane.xlu0 %1415
    %v1417 = vsel %vm272, %v1399, 0.0
    %1418 = vadd.xlane.f32.xlu0 %v1417
    %v1419 = vpop.xlane.xlu0 %1418
    %v1420 = vsel %vm291, %v1401, 0.0
    %1421 = vadd.xlane.f32.xlu0 %v1420
    %v1422 = vpop.xlane.xlu0 %1421
    %v1423 = vrcp.pop %v1404
    %v1424 = vrcp.pop %v1407
    %v1425 = vrcp.pop %v1410
    %v1426 = vrcp.pop %v1413
    %v1427 = vrcp.pop %v1416
    %v1428 = vrcp.pop %v1419
    %v1429 = vrcp.pop %v1422
    %v1430 = vmul.f32 %v1389, %v1423
    %v1431 = vmul.f32 %v1391, %v1424
    %v1432 = vmul.f32 %v1393, %v1425
    %v1433 = vmul.f32 %v1395, %v1426
    %v1434 = vmul.f32 %v1397, %v1427
    %v1435 = vmul.f32 %v1399, %v1428
    %v1436 = vmul.f32 %v1401, %v1429
    %v1437 = vpack.c.bf16 %v1431, %v1430
    %v1438 = vpack.c.bf16 %v1433, %v1432
    %v1439 = vpack.c.bf16 %v1435, %v1434
    %v1440 = vpack.c.bf16 %v1436, %v1436
    %1441 = vrot.lane.b32.xlu0 %v167, 40
    %v1442 = vpop.permute.xlu0 %1441
    %1443 = vrot.lane.b32.xlu0 %v168, 40
    %v1444 = vpop.permute.xlu0 %1443
    %1445 = vrot.lane.b32.xlu0 %v169, 40
    %v1446 = vpop.permute.xlu0 %1445
    %1447 = vrot.lane.b32.xlu0 %v170, 40
    %v1448 = vpop.permute.xlu0 %1447
    %v1453 = vsel %vm272, %v1437, 0
    %v1456 = vsel %vm272, %v1438, 0
    %v1459 = vsel %vm272, %v1439, 0
    %v1462 = vsel %vm272, %v1440, 0
    %v1465 = vsel %vm378, %v1448, 0
    %1467 = vmatprep.subr.bf16.mxu0 0
    %1468 = vmatpush1.bf16.msra.mxu0 %v1442
    %1469 = vmatprep.subr.bf16.mxu0 0
    %1470 = vmatpush1.bf16.msra.mxu0 %v1444
    %1471 = vmatprep.subr.bf16.mxu0 0
    %1472 = vmatpush1.bf16.msra.mxu0 %v1446
    %1473 = vmatprep.subr.bf16.mxu0 0
    %1474 = vmatpush1.bf16.msra.mxu0 %v1465
    %1475 = vmatprep.subr.bf16.mxu0 0
    %1476 = vmatpush1.bf16.msra.mxu0 0
    %1477 = vmatprep.subr.bf16.mxu0 0
    %1478 = vmatpush1.bf16.msra.mxu0 0
    %1479 = vmatprep.subr.bf16.mxu0 0
    %1480 = vmatpush1.bf16.msra.mxu0 0
    %1481 = vmatprep.subr.bf16.mxu0 0
    %1482 = vmatpush1.bf16.msra.mxu0 0
    %1483 = vmatprep.subr.bf16.mxu0 0
    %1484 = vmatpush1.bf16.msra.mxu0 0
    %1485 = vmatprep.subr.bf16.mxu0 0
    %1486 = vmatpush1.bf16.msra.mxu0 0
    %1487 = vmatprep.subr.bf16.mxu0 0
    %1488 = vmatpush1.bf16.msra.mxu0 0
    %1489 = vmatprep.subr.bf16.mxu0 0
    %1490 = vmatpush1.bf16.msra.mxu0 0
    %1491 = vmatprep.subr.bf16.mxu0 0
    %1492 = vmatpush1.bf16.msra.mxu0 0
    %1493 = vmatprep.subr.bf16.mxu0 0
    %1494 = vmatpush1.bf16.msra.mxu0 0
    %1495 = vmatprep.subr.bf16.mxu0 0
    %1496 = vmatpush1.bf16.msra.mxu0 0
    %1497 = vmatprep.subr.bf16.mxu0 0
    %1498 = vmatpush1.bf16.msra.mxu0 0
    %1499 = vmatprep.mubr.bf16.mxu0 0
    %1500 = vmatmul.mubr.bf16.gmra.mrb[0].mxu0 %v1453
    %v1501 = vpop.f32.mrb[0].mxu0
    %v1502 = vadd.f32 0.0, %v1501
    %v1503 = vpop.f32.mrb[0].mxu0
    %v1504 = vpop.f32.mrb[0].mxu0
    %v1505 = vadd.f32 0.0, %v1504
    %v1506 = vpop.f32.mrb[0].mxu0
    %1507 = vmatprep.mubr.bf16.mxu0 0
    %1508 = vmatmul.mubr.bf16.gmra.mrb[0].mxu0 %v1456
    %v1509 = vpop.f32.mrb[0].mxu0
    %v1510 = vadd.f32 0.0, %v1509
    %v1511 = vpop.f32.mrb[0].mxu0
    %v1512 = vpop.f32.mrb[0].mxu0
    %v1513 = vadd.f32 0.0, %v1512
    %v1514 = vpop.f32.mrb[0].mxu0
    %1515 = vmatprep.mubr.bf16.mxu0 0
    %1516 = vmatmul.mubr.bf16.gmra.mrb[0].mxu0 %v1459
    %v1517 = vpop.f32.mrb[0].mxu0
    %v1518 = vadd.f32 0.0, %v1517
    %v1519 = vpop.f32.mrb[0].mxu0
    %v1520 = vpop.f32.mrb[0].mxu0
    %v1521 = vadd.f32 0.0, %v1520
    %v1522 = vpop.f32.mrb[0].mxu0
    %1523 = vmatprep.mubr.bf16.mxu0 0
    %1524 = vmatmul.mubr.bf16.gmra.mrb[0].mxu0 %v1462
    %v1525 = vpop.f32.mrb[0].mxu0
    %v1526 = vadd.f32 0.0, %v1525
    %v1527 = vpop.f32.mrb[0].mxu0
    %v1528 = vpop.f32.mrb[0].mxu0
    %v1529 = vpop.f32.mrb[0].mxu0
    %1530 = vdwg.mxu0
    %v1531 = vpack.c.bf16 %v1505, %v1502
    %v1532 = vpack.c.bf16 %v1513, %v1510
    %v1533 = vpack.c.bf16 %v1521, %v1518
    %v1534 = vpack.c.bf16 %v1526, %v1526
    %v1535 = vpack.c.bf16 %v166, %v166
    %v1537 = vsel %vm183, %v1531, 0
    %v1540 = vsel %vm183, %v1532, 0
    %v1543 = vsel %vm183, %v1533, 0
    %v1546 = vsel %vm183, %v1534, 0
    %v1549 = vsel %vm743, %v1535, 0
    %1551 = vmatprep.subr.bf16.mxu0 0
    %1552 = vmatpush1.bf16.msra.mxu0 %v1549
    %1553 = vmatprep.subr.bf16.mxu0 0
    %1554 = vmatpush1.bf16.msra.mxu0 0
    %1555 = vmatprep.subr.bf16.mxu0 0
    %1556 = vmatpush1.bf16.msra.mxu0 0
    %1557 = vmatprep.subr.bf16.mxu0 0
    %1558 = vmatpush1.bf16.msra.mxu0 0
    %1559 = vmatprep.subr.bf16.mxu0 0
    %1560 = vmatpush1.bf16.msra.mxu0 0
    %1561 = vmatprep.subr.bf16.mxu0 0
    %1562 = vmatpush1.bf16.msra.mxu0 0
    %1563 = vmatprep.subr.bf16.mxu0 0
    %1564 = vmatpush1.bf16.msra.mxu0 0
    %1565 = vmatprep.subr.bf16.mxu0 0
    %1566 = vmatpush1.bf16.msra.mxu0 0
    %1567 = vmatprep.subr.bf16.mxu0 0
    %1568 = vmatpush1.bf16.msra.mxu0 0
    %1569 = vmatprep.subr.bf16.mxu0 0
    %1570 = vmatpush1.bf16.msra.mxu0 0
    %1571 = vmatprep.subr.bf16.mxu0 0
    %1572 = vmatpush1.bf16.msra.mxu0 0
    %1573 = vmatprep.subr.bf16.mxu0 0
    %1574 = vmatpush1.bf16.msra.mxu0 0
    %1575 = vmatprep.subr.bf16.mxu0 0
    %1576 = vmatpush1.bf16.msra.mxu0 0
    %1577 = vmatprep.subr.bf16.mxu0 0
    %1578 = vmatpush1.bf16.msra.mxu0 0
    %1579 = vmatprep.subr.bf16.mxu0 0
    %1580 = vmatpush1.bf16.msra.mxu0 0
    %1581 = vmatprep.subr.bf16.mxu0 0
    %1582 = vmatpush1.bf16.msra.mxu0 0
    %1583 = vmatprep.mubr.bf16.mxu0 0
    %1584 = vmatmul.mubr.bf16.gmra.mrb[0].mxu0 %v1537
    %v1585 = vpop.f32.mrb[0].mxu0
    %v1586 = vadd.f32 0.0, %v1585
    %v1587 = vpop.f32.mrb[0].mxu0
    %v1588 = vpop.f32.mrb[0].mxu0
    %v1589 = vadd.f32 0.0, %v1588
    %v1590 = vpop.f32.mrb[0].mxu0
    %1591 = vmatprep.mubr.bf16.mxu0 0
    %1592 = vmatmul.mubr.bf16.gmra.mrb[0].mxu0 %v1540
    %v1593 = vpop.f32.mrb[0].mxu0
    %v1594 = vadd.f32 0.0, %v1593
    %v1595 = vpop.f32.mrb[0].mxu0
    %v1596 = vpop.f32.mrb[0].mxu0
    %v1597 = vadd.f32 0.0, %v1596
    %v1598 = vpop.f32.mrb[0].mxu0
    %1599 = vmatprep.mubr.bf16.mxu0 0
    %1600 = vmatmul.mubr.bf16.gmra.mrb[0].mxu0 %v1543
    %v1601 = vpop.f32.mrb[0].mxu0
    %v1602 = vadd.f32 0.0, %v1601
    %v1603 = vpop.f32.mrb[0].mxu0
    %v1604 = vpop.f32.mrb[0].mxu0
    %v1605 = vadd.f32 0.0, %v1604
    %v1606 = vpop.f32.mrb[0].mxu0
    %1607 = vmatprep.mubr.bf16.mxu0 0
    %1608 = vmatmul.mubr.bf16.gmra.mrb[0].mxu0 %v1546
    %v1609 = vpop.f32.mrb[0].mxu0
    %v1610 = vadd.f32 0.0, %v1609
    %v1611 = vpop.f32.mrb[0].mxu0
    %v1612 = vpop.f32.mrb[0].mxu0
    %v1613 = vpop.f32.mrb[0].mxu0
    %1614 = vdwg.mxu0
    %v1615 = vadd.f32 %v1249, %v1586
    %v1616 = vadd.f32 %v1250, %v1589
    %v1617 = vadd.f32 %v1251, %v1594
    %v1618 = vadd.f32 %v1252, %v1597
    %v1619 = vadd.f32 %v1253, %v1602
    %v1620 = vadd.f32 %v1254, %v1605
    %v1621 = vadd.f32 %v1255, %v1610
    %v1622 = vld [vmem:[%s4] sm:$0x1]
    %v1624 = vlaneseq
    %v1625 = vshrl.u32 %v1624, 7
    %v1626 = vsub.s32 0, %v1625
    %v1627 = vrot.slane %v1622, %v1626
    %v1629 = vadd.f32 %v1615, %v1627
    %v1630 = vadd.f32 %v1616, %v1627
    %v1631 = vadd.f32 %v1617, %v1627
    %v1632 = vadd.f32 %v1618, %v1627
    %v1633 = vadd.f32 %v1619, %v1627
    %v1634 = vadd.f32 %v1620, %v1627
    %v1635 = vadd.f32 %v1621, %v1627
    %v1636 = vadd.f32 %v52, %v1629
    %v1637 = vadd.f32 %v53, %v1630
    %v1638 = vadd.f32 %v54, %v1631
    %v1639 = vadd.f32 %v55, %v1632
    %v1640 = vadd.f32 %v56, %v1633
    %v1641 = vadd.f32 %v57, %v1634
    %v1642 = vadd.f32 %v58, %v1635
    %v1643 = vld [vmem:[%s5] sm:$0x1]
    %v1644 = vld [vmem:[%s6] sm:$0x1]
    %v1645 = vsel %vm86, %v1636, 0.0
    %1646 = vadd.xlane.f32.xlu0 %v1645
    %v1647 = vpop.xlane.xlu0 %1646
    %v1648 = vsel %vm86, %v1637, 0.0
    %1649 = vadd.xlane.f32.xlu0 %v1648
    %v1650 = vpop.xlane.xlu0 %1649
    %v1651 = vsel %vm86, %v1638, 0.0
    %1652 = vadd.xlane.f32.xlu0 %v1651
    %v1653 = vpop.xlane.xlu0 %1652
    %v1654 = vsel %vm86, %v1639, 0.0
    %1655 = vadd.xlane.f32.xlu0 %v1654
    %v1656 = vpop.xlane.xlu0 %1655
    %v1657 = vsel %vm86, %v1640, 0.0
    %1658 = vadd.xlane.f32.xlu0 %v1657
    %v1659 = vpop.xlane.xlu0 %1658
    %v1660 = vsel %vm86, %v1641, 0.0
    %1661 = vadd.xlane.f32.xlu0 %v1660
    %v1662 = vpop.xlane.xlu0 %1661
    %vm1663 = vcmask 254976
    %v1664 = vsel %vm1663, %v1642, 0.0
    %1665 = vadd.xlane.f32.xlu0 %v1664
    %v1666 = vpop.xlane.xlu0 %1665
    %v1667 = vrcp.pop 32.0
    %v1668 = vmul.f32 %v1647, %v1667
    %v1669 = vmul.f32 %v1650, %v1667
    %v1670 = vmul.f32 %v1653, %v1667
    %v1671 = vmul.f32 %v1656, %v1667
    %v1672 = vmul.f32 %v1659, %v1667
    %v1673 = vmul.f32 %v1662, %v1667
    %v1674 = vmul.f32 %v1666, %v1667
    %v1675 = vsub.f32 %v1636, %v1668
    %v1676 = vsub.f32 %v1637, %v1669
    %v1677 = vsub.f32 %v1638, %v1670
    %v1678 = vsub.f32 %v1639, %v1671
    %v1679 = vsub.f32 %v1640, %v1672
    %v1680 = vsub.f32 %v1641, %v1673
    %v1681 = vsub.f32 %v1642, %v1674
    %v1682 = vmul.f32 %v1675, %v1675
    %v1683 = vmul.f32 %v1676, %v1676
    %v1684 = vmul.f32 %v1677, %v1677
    %v1685 = vmul.f32 %v1678, %v1678
    %v1686 = vmul.f32 %v1679, %v1679
    %v1687 = vmul.f32 %v1680, %v1680
    %v1688 = vmul.f32 %v1681, %v1681
    %v1689 = vsel %vm86, %v1682, 0.0
    %1690 = vadd.xlane.f32.xlu0 %v1689
    %v1691 = vpop.xlane.xlu0 %1690
    %v1692 = vsel %vm86, %v1683, 0.0
    %1693 = vadd.xlane.f32.xlu0 %v1692
    %v1694 = vpop.xlane.xlu0 %1693
    %v1695 = vsel %vm86, %v1684, 0.0
    %1696 = vadd.xlane.f32.xlu0 %v1695
    %v1697 = vpop.xlane.xlu0 %1696
    %v1698 = vsel %vm86, %v1685, 0.0
    %1699 = vadd.xlane.f32.xlu0 %v1698
    %v1700 = vpop.xlane.xlu0 %1699
    %v1701 = vsel %vm86, %v1686, 0.0
    %1702 = vadd.xlane.f32.xlu0 %v1701
    %v1703 = vpop.xlane.xlu0 %1702
    %v1704 = vsel %vm86, %v1687, 0.0
    %1705 = vadd.xlane.f32.xlu0 %v1704
    %v1706 = vpop.xlane.xlu0 %1705
    %v1707 = vsel %vm1663, %v1688, 0.0
    %1708 = vadd.xlane.f32.xlu0 %v1707
    %v1709 = vpop.xlane.xlu0 %1708
    %v1710 = vmul.f32 %v1691, %v1667
    %v1711 = vmul.f32 %v1694, %v1667
    %v1712 = vmul.f32 %v1697, %v1667
    %v1713 = vmul.f32 %v1700, %v1667
    %v1714 = vmul.f32 %v1703, %v1667
    %v1715 = vmul.f32 %v1706, %v1667
    %v1716 = vmul.f32 %v1709, %v1667
    %v1717 = vadd.f32 %v1710, 1e-05
    %v1718 = vadd.f32 %v1711, 1e-05
    %v1719 = vadd.f32 %v1712, 1e-05
    %v1720 = vadd.f32 %v1713, 1e-05
    %v1721 = vadd.f32 %v1714, 1e-05
    %v1722 = vadd.f32 %v1715, 1e-05
    %v1723 = vadd.f32 %v1716, 1e-05
    %v1724 = vrsqrt.pop %v1717
    %v1725 = vrsqrt.pop %v1718
    %v1726 = vrsqrt.pop %v1719
    %v1727 = vrsqrt.pop %v1720
    %v1728 = vrsqrt.pop %v1721
    %v1729 = vrsqrt.pop %v1722
    %v1730 = vrsqrt.pop %v1723
    %v1731 = vmul.f32 %v1675, %v1724
    %v1732 = vmul.f32 %v1676, %v1725
    %v1733 = vmul.f32 %v1677, %v1726
    %v1734 = vmul.f32 %v1678, %v1727
    %v1735 = vmul.f32 %v1679, %v1728
    %v1736 = vmul.f32 %v1680, %v1729
    %v1737 = vmul.f32 %v1681, %v1730
    %v1739 = vlaneseq
    %v1740 = vshrl.u32 %v1739, 7
    %v1741 = vsub.s32 0, %v1740
    %v1742 = vrot.slane %v1643, %v1741
    %v1744 = vmul.f32 %v1731, %v1742
    %v1745 = vmul.f32 %v1732, %v1742
    %v1746 = vmul.f32 %v1733, %v1742
    %v1747 = vmul.f32 %v1734, %v1742
    %v1748 = vmul.f32 %v1735, %v1742
    %v1749 = vmul.f32 %v1736, %v1742
    %v1750 = vmul.f32 %v1737, %v1742
    %v1752 = vlaneseq
    %v1753 = vshrl.u32 %v1752, 7
    %v1754 = vsub.s32 0, %v1753
    %v1755 = vrot.slane %v1644, %v1754
    %v1757 = vadd.f32 %v1744, %v1755
    %v1758 = vadd.f32 %v1745, %v1755
    %v1759 = vadd.f32 %v1746, %v1755
    %v1760 = vadd.f32 %v1747, %v1755
    %v1761 = vadd.f32 %v1748, %v1755
    %v1762 = vadd.f32 %v1749, %v1755
    %v1763 = vadd.f32 %v1750, %v1755
    %v1764 = vpack.c.bf16 %v1758, %v1757
    %v1765 = vpack.c.bf16 %v1760, %v1759
    %v1766 = vpack.c.bf16 %v1762, %v1761
    %v1767 = vpack.c.bf16 %v1763, %v1763
    %v1768 = vld [vmem:[%s7] sm:$0xf]
    %v1769 = vld [vmem:[%s7 + $0x4] sm:$0xf]
    %v1770 = vld [vmem:[%s7 + $0x8] sm:$0xf]
    %v1771 = vld [vmem:[%s7 + $0xc] sm:$0xf]
    %v1772 = vld [vmem:[%s8] sm:$0x1]
    %v1774 = vlaneseq
    %v1775 = vshrl.u32 %v1774, 7
    %v1776 = vsub.s32 0, %v1775
    %v1777 = vrot.slane %v1772, %v1776
    %v1783 = vunpack.c.l.b16 %v1768
    %v1784 = vunpack.c.l.b16 %v1769
    %v1785 = vunpack.c.l.b16 %v1770
    %v1786 = vunpack.c.l.b16 %v1771
    %v1787 = vpack.c.b16 %v1784, %v1783
    %v1788 = vpack.c.b16 %v1786, %v1785
    %v1792 = vsel %vm86, %v1764, 0
    %v1795 = vsel %vm86, %v1765, 0
    %v1798 = vsel %vm86, %v1766, 0
    %v1801 = vsel %vm86, %v1767, 0
    %1803 = vmatprep.subr.bf16.mxu0 0
    %1804 = vmatpush1.bf16.msra.mxu0 %v1787
    %1805 = vmatprep.subr.bf16.mxu0 0
    %1806 = vmatpush1.bf16.msra.mxu0 %v1788
    %1807 = vmatprep.subr.bf16.mxu0 0
    %1808 = vmatpush1.bf16.msra.mxu0 0
    %1809 = vmatprep.subr.bf16.mxu0 0
    %1810 = vmatpush1.bf16.msra.mxu0 0
    %1811 = vmatprep.subr.bf16.mxu0 0
    %1812 = vmatpush1.bf16.msra.mxu0 0
    %1813 = vmatprep.subr.bf16.mxu0 0
    %1814 = vmatpush1.bf16.msra.mxu0 0
    %1815 = vmatprep.subr.bf16.mxu0 0
    %1816 = vmatpush1.bf16.msra.mxu0 0
    %1817 = vmatprep.subr.bf16.mxu0 0
    %1818 = vmatpush1.bf16.msra.mxu0 0
    %1819 = vmatprep.subr.bf16.mxu0 0
    %1820 = vmatpush1.bf16.msra.mxu0 0
    %1821 = vmatprep.subr.bf16.mxu0 0
    %1822 = vmatpush1.bf16.msra.mxu0 0
    %1823 = vmatprep.subr.bf16.mxu0 0
    %1824 = vmatpush1.bf16.msra.mxu0 0
    %1825 = vmatprep.subr.bf16.mxu0 0
    %1826 = vmatpush1.bf16.msra.mxu0 0
    %1827 = vmatprep.subr.bf16.mxu0 0
    %1828 = vmatpush1.bf16.msra.mxu0 0
    %1829 = vmatprep.subr.bf16.mxu0 0
    %1830 = vmatpush1.bf16.msra.mxu0 0
    %1831 = vmatprep.subr.bf16.mxu0 0
    %1832 = vmatpush1.bf16.msra.mxu0 0
    %1833 = vmatprep.subr.bf16.mxu0 0
    %1834 = vmatpush1.bf16.msra.mxu0 0
    %1835 = vmatprep.mubr.bf16.mxu0 0
    %1836 = vmatmul.mubr.bf16.gmra.mrb[0].mxu0 %v1792
    %v1837 = vpop.f32.mrb[0].mxu0
    %v1838 = vadd.f32 %v1777, %v1837
    %v1839 = vpop.f32.mrb[0].mxu0
    %v1840 = vpop.f32.mrb[0].mxu0
    %v1841 = vadd.f32 %v1777, %v1840
    %v1842 = vpop.f32.mrb[0].mxu0
    %1843 = vmatprep.mubr.bf16.mxu0 0
    %1844 = vmatmul.mubr.bf16.gmra.mrb[0].mxu0 %v1795
    %v1845 = vpop.f32.mrb[0].mxu0
    %v1846 = vadd.f32 %v1777, %v1845
    %v1847 = vpop.f32.mrb[0].mxu0
    %v1848 = vpop.f32.mrb[0].mxu0
    %v1849 = vadd.f32 %v1777, %v1848
    %v1850 = vpop.f32.mrb[0].mxu0
    %1851 = vmatprep.mubr.bf16.mxu0 0
    %1852 = vmatmul.mubr.bf16.gmra.mrb[0].mxu0 %v1798
    %v1853 = vpop.f32.mrb[0].mxu0
    %v1854 = vadd.f32 %v1777, %v1853
    %v1855 = vpop.f32.mrb[0].mxu0
    %v1856 = vpop.f32.mrb[0].mxu0
    %v1857 = vadd.f32 %v1777, %v1856
    %v1858 = vpop.f32.mrb[0].mxu0
    %1859 = vmatprep.mubr.bf16.mxu0 0
    %1860 = vmatmul.mubr.bf16.gmra.mrb[0].mxu0 %v1801
    %v1861 = vpop.f32.mrb[0].mxu0
    %v1862 = vadd.f32 %v1777, %v1861
    %v1863 = vpop.f32.mrb[0].mxu0
    %v1864 = vpop.f32.mrb[0].mxu0
    %v1865 = vpop.f32.mrb[0].mxu0
    %1866 = vdwg.mxu0
    %v1867 = vmax.f32 %v1838, 0.0
    %v1868 = vmax.f32 %v1841, 0.0
    %v1869 = vmax.f32 %v1846, 0.0
    %v1870 = vmax.f32 %v1849, 0.0
    %v1871 = vmax.f32 %v1854, 0.0
    %v1872 = vmax.f32 %v1857, 0.0
    %v1873 = vmax.f32 %v1862, 0.0
    %v1874 = vpack.c.bf16 %v1868, %v1867
    %v1875 = vpack.c.bf16 %v1870, %v1869
    %v1876 = vpack.c.bf16 %v1872, %v1871
    %v1877 = vpack.c.bf16 %v1873, %v1873
    %v1878 = vld [vmem:[%s9] sm:$0xf]
    %v1879 = vld [vmem:[%s9 + $0x4] sm:$0xf]
    %v1880 = vld [vmem:[%s9 + $0x8] sm:$0xf]
    %v1881 = vld [vmem:[%s9 + $0xc] sm:$0xf]
    %v1882 = vld [vmem:[%s9 + $0x10] sm:$0xf]
    %v1883 = vld [vmem:[%s9 + $0x14] sm:$0xf]
    %v1884 = vld [vmem:[%s9 + $0x18] sm:$0xf]
    %v1885 = vld [vmem:[%s9 + $0x1c] sm:$0xf]
    %v1886 = vld [vmem:[%s10] sm:$0x1]
    %v1888 = vlaneseq
    %v1889 = vshrl.u32 %v1888, 7
    %v1890 = vsub.s32 0, %v1889
    %v1891 = vrot.slane %v1886, %v1890
    %v1901 = vunpack.c.l.b16 %v1878
    %v1902 = vunpack.c.l.b16 %v1879
    %v1903 = vunpack.c.l.b16 %v1880
    %v1904 = vunpack.c.l.b16 %v1881
    %v1905 = vunpack.c.l.b16 %v1882
    %v1906 = vunpack.c.l.b16 %v1883
    %v1907 = vunpack.c.l.b16 %v1884
    %v1908 = vunpack.c.l.b16 %v1885
    %v1909 = vpack.c.b16 %v1902, %v1901
    %v1910 = vpack.c.b16 %v1904, %v1903
    %v1911 = vpack.c.b16 %v1906, %v1905
    %v1912 = vpack.c.b16 %v1908, %v1907
    %vm1917 = vcmask 523264
    %v1919 = vsel %vm1917, %v1874, 0
    %v1922 = vsel %vm1917, %v1875, 0
    %v1925 = vsel %vm1917, %v1876, 0
    %v1928 = vsel %vm1917, %v1877, 0
    %1930 = vmatprep.subr.bf16.mxu0 0
    %1931 = vmatpush1.bf16.msra.mxu0 %v1909
    %1932 = vmatprep.subr.bf16.mxu0 0
    %1933 = vmatpush1.bf16.msra.mxu0 %v1910
    %1934 = vmatprep.subr.bf16.mxu0 0
    %1935 = vmatpush1.bf16.msra.mxu0 %v1911
    %1936 = vmatprep.subr.bf16.mxu0 0
    %1937 = vmatpush1.bf16.msra.mxu0 %v1912
    %1938 = vmatprep.subr.bf16.mxu0 0
    %1939 = vmatpush1.bf16.msra.mxu0 0
    %1940 = vmatprep.subr.bf16.mxu0 0
    %1941 = vmatpush1.bf16.msra.mxu0 0
    %1942 = vmatprep.subr.bf16.mxu0 0
    %1943 = vmatpush1.bf16.msra.mxu0 0
    %1944 = vmatprep.subr.bf16.mxu0 0
    %1945 = vmatpush1.bf16.msra.mxu0 0
    %1946 = vmatprep.subr.bf16.mxu0 0
    %1947 = vmatpush1.bf16.msra.mxu0 0
    %1948 = vmatprep.subr.bf16.mxu0 0
    %1949 = vmatpush1.bf16.msra.mxu0 0
    %1950 = vmatprep.subr.bf16.mxu0 0
    %1951 = vmatpush1.bf16.msra.mxu0 0
    %1952 = vmatprep.subr.bf16.mxu0 0
    %1953 = vmatpush1.bf16.msra.mxu0 0
    %1954 = vmatprep.subr.bf16.mxu0 0
    %1955 = vmatpush1.bf16.msra.mxu0 0
    %1956 = vmatprep.subr.bf16.mxu0 0
    %1957 = vmatpush1.bf16.msra.mxu0 0
    %1958 = vmatprep.subr.bf16.mxu0 0
    %1959 = vmatpush1.bf16.msra.mxu0 0
    %1960 = vmatprep.subr.bf16.mxu0 0
    %1961 = vmatpush1.bf16.msra.mxu0 0
    %1962 = vmatprep.mubr.bf16.mxu0 0
    %1963 = vmatmul.mubr.bf16.gmra.mrb[0].mxu0 %v1919
    %v1964 = vpop.f32.mrb[0].mxu0
    %v1965 = vadd.f32 %v1891, %v1964
    %v1966 = vpop.f32.mrb[0].mxu0
    %v1967 = vpop.f32.mrb[0].mxu0
    %v1968 = vadd.f32 %v1891, %v1967
    %v1969 = vpop.f32.mrb[0].mxu0
    %1970 = vmatprep.mubr.bf16.mxu0 0
    %1971 = vmatmul.mubr.bf16.gmra.mrb[0].mxu0 %v1922
    %v1972 = vpop.f32.mrb[0].mxu0
    %v1973 = vadd.f32 %v1891, %v1972
    %v1974 = vpop.f32.mrb[0].mxu0
    %v1975 = vpop.f32.mrb[0].mxu0
    %v1976 = vadd.f32 %v1891, %v1975
    %v1977 = vpop.f32.mrb[0].mxu0
    %1978 = vmatprep.mubr.bf16.mxu0 0
    %1979 = vmatmul.mubr.bf16.gmra.mrb[0].mxu0 %v1925
    %v1980 = vpop.f32.mrb[0].mxu0
    %v1981 = vadd.f32 %v1891, %v1980
    %v1982 = vpop.f32.mrb[0].mxu0
    %v1983 = vpop.f32.mrb[0].mxu0
    %v1984 = vadd.f32 %v1891, %v1983
    %v1985 = vpop.f32.mrb[0].mxu0
    %1986 = vmatprep.mubr.bf16.mxu0 0
    %1987 = vmatmul.mubr.bf16.gmra.mrb[0].mxu0 %v1928
    %v1988 = vpop.f32.mrb[0].mxu0
    %v1989 = vadd.f32 %v1891, %v1988
    %v1990 = vpop.f32.mrb[0].mxu0
    %v1991 = vpop.f32.mrb[0].mxu0
    %v1992 = vpop.f32.mrb[0].mxu0
    %1993 = vdwg.mxu0
    %v1994 = vadd.f32 %v1757, %v1965
    %v1995 = vadd.f32 %v1758, %v1968
    %v1996 = vadd.f32 %v1759, %v1973
    %v1997 = vadd.f32 %v1760, %v1976
    %v1998 = vadd.f32 %v1761, %v1981
    %v1999 = vadd.f32 %v1762, %v1984
    %v2000 = vadd.f32 %v1763, %v1989
    %v2001 = vld [vmem:[%s11] sm:$0x1]
    %v2002 = vld [vmem:[%s12] sm:$0x1]
    %v2003 = vsel %vm86, %v1994, 0.0
    %2004 = vadd.xlane.f32.xlu0 %v2003
    %v2005 = vpop.xlane.xlu0 %2004
    %v2006 = vsel %vm86, %v1995, 0.0
    %2007 = vadd.xlane.f32.xlu0 %v2006
    %v2008 = vpop.xlane.xlu0 %2007
    %v2009 = vsel %vm86, %v1996, 0.0
    %2010 = vadd.xlane.f32.xlu0 %v2009
    %v2011 = vpop.xlane.xlu0 %2010
    %v2012 = vsel %vm86, %v1997, 0.0
    %2013 = vadd.xlane.f32.xlu0 %v2012
    %v2014 = vpop.xlane.xlu0 %2013
    %v2015 = vsel %vm86, %v1998, 0.0
    %2016 = vadd.xlane.f32.xlu0 %v2015
    %v2017 = vpop.xlane.xlu0 %2016
    %v2018 = vsel %vm86, %v1999, 0.0
    %2019 = vadd.xlane.f32.xlu0 %v2018
    %v2020 = vpop.xlane.xlu0 %2019
    %v2021 = vsel %vm1663, %v2000, 0.0
    %2022 = vadd.xlane.f32.xlu0 %v2021
    %v2023 = vpop.xlane.xlu0 %2022
    %v2024 = vmul.f32 %v2005, %v1667
    %v2025 = vmul.f32 %v2008, %v1667
    %v2026 = vmul.f32 %v2011, %v1667
    %v2027 = vmul.f32 %v2014, %v1667
    %v2028 = vmul.f32 %v2017, %v1667
    %v2029 = vmul.f32 %v2020, %v1667
    %v2030 = vmul.f32 %v2023, %v1667
    %v2031 = vsub.f32 %v1994, %v2024
    %v2032 = vsub.f32 %v1995, %v2025
    %v2033 = vsub.f32 %v1996, %v2026
    %v2034 = vsub.f32 %v1997, %v2027
    %v2035 = vsub.f32 %v1998, %v2028
    %v2036 = vsub.f32 %v1999, %v2029
    %v2037 = vsub.f32 %v2000, %v2030
    %v2038 = vmul.f32 %v2031, %v2031
    %v2039 = vmul.f32 %v2032, %v2032
    %v2040 = vmul.f32 %v2033, %v2033
    %v2041 = vmul.f32 %v2034, %v2034
    %v2042 = vmul.f32 %v2035, %v2035
    %v2043 = vmul.f32 %v2036, %v2036
    %v2044 = vmul.f32 %v2037, %v2037
    %v2045 = vsel %vm86, %v2038, 0.0
    %2046 = vadd.xlane.f32.xlu0 %v2045
    %v2047 = vpop.xlane.xlu0 %2046
    %v2048 = vsel %vm86, %v2039, 0.0
    %2049 = vadd.xlane.f32.xlu0 %v2048
    %v2050 = vpop.xlane.xlu0 %2049
    %v2051 = vsel %vm86, %v2040, 0.0
    %2052 = vadd.xlane.f32.xlu0 %v2051
    %v2053 = vpop.xlane.xlu0 %2052
    %v2054 = vsel %vm86, %v2041, 0.0
    %2055 = vadd.xlane.f32.xlu0 %v2054
    %v2056 = vpop.xlane.xlu0 %2055
    %v2057 = vsel %vm86, %v2042, 0.0
    %2058 = vadd.xlane.f32.xlu0 %v2057
    %v2059 = vpop.xlane.xlu0 %2058
    %v2060 = vsel %vm86, %v2043, 0.0
    %2061 = vadd.xlane.f32.xlu0 %v2060
    %v2062 = vpop.xlane.xlu0 %2061
    %v2063 = vsel %vm1663, %v2044, 0.0
    %2064 = vadd.xlane.f32.xlu0 %v2063
    %v2065 = vpop.xlane.xlu0 %2064
    %v2066 = vmul.f32 %v2047, %v1667
    %v2067 = vmul.f32 %v2050, %v1667
    %v2068 = vmul.f32 %v2053, %v1667
    %v2069 = vmul.f32 %v2056, %v1667
    %v2070 = vmul.f32 %v2059, %v1667
    %v2071 = vmul.f32 %v2062, %v1667
    %v2072 = vmul.f32 %v2065, %v1667
    %v2073 = vadd.f32 %v2066, 1e-05
    %v2074 = vadd.f32 %v2067, 1e-05
    %v2075 = vadd.f32 %v2068, 1e-05
    %v2076 = vadd.f32 %v2069, 1e-05
    %v2077 = vadd.f32 %v2070, 1e-05
    %v2078 = vadd.f32 %v2071, 1e-05
    %v2079 = vadd.f32 %v2072, 1e-05
    %v2080 = vrsqrt.pop %v2073
    %v2081 = vrsqrt.pop %v2074
    %v2082 = vrsqrt.pop %v2075
    %v2083 = vrsqrt.pop %v2076
    %v2084 = vrsqrt.pop %v2077
    %v2085 = vrsqrt.pop %v2078
    %v2086 = vrsqrt.pop %v2079
    %v2087 = vmul.f32 %v2031, %v2080
    %v2088 = vmul.f32 %v2032, %v2081
    %v2089 = vmul.f32 %v2033, %v2082
    %v2090 = vmul.f32 %v2034, %v2083
    %v2091 = vmul.f32 %v2035, %v2084
    %v2092 = vmul.f32 %v2036, %v2085
    %v2093 = vmul.f32 %v2037, %v2086
    %v2095 = vlaneseq
    %v2096 = vshrl.u32 %v2095, 7
    %v2097 = vsub.s32 0, %v2096
    %v2098 = vrot.slane %v2001, %v2097
    %v2100 = vmul.f32 %v2087, %v2098
    %v2101 = vmul.f32 %v2088, %v2098
    %v2102 = vmul.f32 %v2089, %v2098
    %v2103 = vmul.f32 %v2090, %v2098
    %v2104 = vmul.f32 %v2091, %v2098
    %v2105 = vmul.f32 %v2092, %v2098
    %v2106 = vmul.f32 %v2093, %v2098
    %v2108 = vlaneseq
    %v2109 = vshrl.u32 %v2108, 7
    %v2110 = vsub.s32 0, %v2109
    %v2111 = vrot.slane %v2002, %v2110
    %v2113 = vadd.f32 %v2100, %v2111
    %v2114 = vadd.f32 %v2101, %v2111
    %v2115 = vadd.f32 %v2102, %v2111
    %v2116 = vadd.f32 %v2103, %v2111
    %v2117 = vadd.f32 %v2104, %v2111
    %v2118 = vadd.f32 %v2105, %v2111
    %v2119 = vadd.f32 %v2106, %v2111
    %v2120 = vsel %vm86, %v2113, 0.0
    %v2121 = vsel %vm86, %v2114, 0.0
    %v2122 = vadd.f32 %v2120, %v2121
    %v2123 = vsel %vm86, %v2115, 0.0
    %v2124 = vadd.f32 %v2122, %v2123
    %v2125 = vsel %vm86, %v2116, 0.0
    %v2126 = vadd.f32 %v2124, %v2125
    %v2127 = vsel %vm86, %v2117, 0.0
    %v2128 = vadd.f32 %v2126, %v2127
    %v2129 = vsel %vm86, %v2118, 0.0
    %v2130 = vadd.f32 %v2128, %v2129
    %v2131 = vsel %vm1663, %v2119, 0.0
    %v2132 = vadd.f32 %v2130, %v2131
    %v2133 = vrot.slane %v2132, 4
    %v2134 = vadd.f32 %v2132, %v2133
    %v2135 = vrot.slane %v2134, 2
    %v2136 = vadd.f32 %v2134, %v2135
    %v2137 = vrot.slane %v2136, 1
    %v2138 = vadd.f32 %v2136, %v2137
    %v2139 = vsub.f32 %v2138, %v2113
    %v2140 = vmul.f32 %v2139, 0.020408163
    %v2141 = vpack.c.bf16 %v2140, %v2140
    %v2142 = vld [vmem:[%s13] sm:$0xf]
    %v2143 = vld [vmem:[%s13 + $0x4] sm:$0xf]
    %v2144 = vld [vmem:[%s13 + $0x8] sm:$0xf]
    %v2145 = vld [vmem:[%s13 + $0xc] sm:$0xf]
    %v2146 = vld [vmem:[%s14] sm:$0x1]
    %v2151 = vunpack.c.l.b16 %v2142
    %v2152 = vunpack.c.l.b16 %v2143
    %v2153 = vunpack.c.l.b16 %v2144
    %v2154 = vunpack.c.l.b16 %v2145
    %v2155 = vpack.c.b16 %v2152, %v2151
    %v2156 = vpack.c.b16 %v2154, %v2153
    %v2160 = vsel %vm86, %v2141, 0
    %2162 = vmatprep.subr.bf16.mxu0 0
    %2163 = vmatpush1.bf16.msra.mxu0 %v2155
    %2164 = vmatprep.subr.bf16.mxu0 0
    %2165 = vmatpush1.bf16.msra.mxu0 %v2156
    %2166 = vmatprep.subr.bf16.mxu0 0
    %2167 = vmatpush1.bf16.msra.mxu0 0
    %2168 = vmatprep.subr.bf16.mxu0 0
    %2169 = vmatpush1.bf16.msra.mxu0 0
    %2170 = vmatprep.subr.bf16.mxu0 0
    %2171 = vmatpush1.bf16.msra.mxu0 0
    %2172 = vmatprep.subr.bf16.mxu0 0
    %2173 = vmatpush1.bf16.msra.mxu0 0
    %2174 = vmatprep.subr.bf16.mxu0 0
    %2175 = vmatpush1.bf16.msra.mxu0 0
    %2176 = vmatprep.subr.bf16.mxu0 0
    %2177 = vmatpush1.bf16.msra.mxu0 0
    %2178 = vmatprep.subr.bf16.mxu0 0
    %2179 = vmatpush1.bf16.msra.mxu0 0
    %2180 = vmatprep.subr.bf16.mxu0 0
    %2181 = vmatpush1.bf16.msra.mxu0 0
    %2182 = vmatprep.subr.bf16.mxu0 0
    %2183 = vmatpush1.bf16.msra.mxu0 0
    %2184 = vmatprep.subr.bf16.mxu0 0
    %2185 = vmatpush1.bf16.msra.mxu0 0
    %2186 = vmatprep.subr.bf16.mxu0 0
    %2187 = vmatpush1.bf16.msra.mxu0 0
    %2188 = vmatprep.subr.bf16.mxu0 0
    %2189 = vmatpush1.bf16.msra.mxu0 0
    %2190 = vmatprep.subr.bf16.mxu0 0
    %2191 = vmatpush1.bf16.msra.mxu0 0
    %2192 = vmatprep.subr.bf16.mxu0 0
    %2193 = vmatpush1.bf16.msra.mxu0 0
    %2194 = vmatprep.mubr.bf16.mxu0 0
    %2195 = vmatmul.mubr.bf16.gmra.mrb[0].mxu0 %v2160
    %v2196 = vpop.f32.mrb[0].mxu0
    %v2197 = vadd.f32 %v2146, %v2196
    %v2198 = vpop.f32.mrb[0].mxu0
    %v2199 = vpop.f32.mrb[0].mxu0
    %v2200 = vpop.f32.mrb[0].mxu0
    %2201 = vdwg.mxu0
    %2202 = vst [vmem:[#allocation2] sm:$0x1] %v2197
    // Predicated region
    $region62: #{vit_forward.1} parent=1 // pred_check
      _
    $region63: #{vit_forward.1} parent=1 // pred_check_branch
      %2204 = sbr.rel (0) target = $region65
    $region64: #{vit_forward.1} parent=1 // pred_region
      %s2206 = ssub.s32 16, 16
      %2207 = vsyncadd [#allocation3], %s2206
      %s2209 = sshll.u32 [#allocation2], 4
      %s2210 = int_to_ptr.vmem [resolvable:$true] %s2209
      %2212 = dma.vmem_to_hbm [thread:$0]  %s2210, 16, %s15, [#allocation3]
    $region65: #{vit_forward.1} parent=1 // pred_fallthru
      _
    // Predicated region
    $region66: #{vit_forward.1} parent=1 // pred_check
      _
    $region67: #{vit_forward.1} parent=1 // pred_check_branch
      %2214 = sbr.rel (0) target = $region69
    $region68: #{vit_forward.1} parent=1 // pred_region
      %2215 = dma.done [#allocation3], 16
    $region69: #{vit_forward.1} parent=1 // pred_fallthru
      _
    %2216 = vsyncpa [#allocation3], 1

</llo_original>
